<compile_context>
chip_gen: v5e
topology: v5e:2x2
jax: 0.10.0
libtpu: 0.0.40
codegen_flags: <defaults>
</compile_context>

<pallas_src>
import jax
import jax.numpy as jnp
from jax.experimental import pallas as pl
from jax.experimental.pallas import tpu as pltpu

N_STATE = 4
H1 = 128
H_VALUE = 256
H_ADV = 512
V_OUT = 1
N_ACTION = 512

H_VA = H_VALUE + H_ADV  # fused fc_value + fc_adv output width (768)


def _cdiv(a, b):
    return -(-a // b)


def _round_up(n, m):
    return _cdiv(n, m) * m


def qnet_kernel(x_ref, w1_ref, b1_ref, wva_ref, bva_ref,
                wval_ref, bval_ref, wadv_ref, badv_ref, q_ref):
    x = x_ref[...]                                   # (TB, 4)   f32
    w1 = w1_ref[...]                                 # (4, 128)  f32

    # fc1 on the VPU: K=4 contraction as 4 broadcast-FMAs (MXU would be >96% padding).
    y = b1_ref[...]                                  # (1, 128) -> broadcasts to (TB, 128)
    for k in range(N_STATE):
        y = y + x[:, k:k + 1] * w1[k:k + 1, :]
    y = jnp.maximum(y, 0.0)                          # (TB, 128) f32

    # Fused fc_value + fc_adv: single MXU matmul 128 -> 768, bf16 inputs, f32 accumulation.
    h = jnp.dot(y.astype(jnp.bfloat16), wva_ref[...],
                preferred_element_type=jnp.float32) + bva_ref[...]
    h = jnp.maximum(h, 0.0)                          # (TB, 768) f32
    v = h[:, :H_VALUE]                               # (TB, 256)  slice at 256 is (8,128)-aligned
    a = h[:, H_VALUE:]                               # (TB, 512)

    # Value head (256 -> 1): VPU multiply + XLU row-sum (skip an N=1 MXU matmul).
    val = jnp.sum(v * wval_ref[...], axis=-1, keepdims=True) + bval_ref[...]   # (TB, 1)

    # Advantage head (512 -> 512): MXU, bf16 inputs, f32 accumulation.
    adv = jnp.dot(a.astype(jnp.bfloat16), wadv_ref[...],
                  preferred_element_type=jnp.float32) + badv_ref[...]          # (TB, 512)

    # Q = val + adv - mean(adv): fold the (TB,1) terms first so only ONE full-width
    # (TB,512) VPU pass remains (review: VPU is the binding slot on v7x).
    corr = val - jnp.sum(adv, axis=-1, keepdims=True) * jnp.float32(1.0 / N_ACTION)
    q_ref[...] = (adv + corr).astype(q_ref.dtype)                              # (TB, 512)


def _resident_spec(shape):
    """Full-array, constant-index weight block.  Single-buffered: the block index never
    changes across grid steps, so the default second pipeline buffer is dead VMEM."""
    try:
        return pl.BlockSpec(shape, lambda i: (0, 0), pipeline_mode=pl.Buffered(1))
    except (TypeError, AttributeError):
        # Older Pallas without pipeline_mode / Buffered: fall back to default buffering.
        return pl.BlockSpec(shape, lambda i: (0, 0))


def _choose_batch_tiling(B, block_b, min_grid_steps):
    """Pick (tile_rows, padded_batch).  Ensures >=min_grid_steps grid steps when the
    batch allows it (8-row minimum tile) so the parallel batch axis uses both TCs on
    v7x, and keeps padding to at most a few rows instead of nearly a whole tile."""
    n_steps = max(1, _cdiv(B, block_b))
    if B >= 8 * min_grid_steps:
        n_steps = max(n_steps, min_grid_steps)
    tb = _round_up(_cdiv(B, n_steps), 8)
    Bp = _round_up(B, tb)
    return tb, Bp


def qnetwork_forward(x, params, *, block_b=1024, min_grid_steps=2,
                     out_dtype=jnp.float32, vmem_limit_bytes=48 * 1024 * 1024):
    """Batch-tiled forward.  block_b=1024 -> ~12-13 MiB live per step (2x2 MiB q
    buffers + ~7 MiB intermediates + ~0.7 MiB single-buffered weights), comfortably
    under the 48 MiB scoped limit and under v7x's 64 MiB physical VMEM.
    Set out_dtype=jnp.bfloat16 if downstream consumers accept bf16 Q-values (halves
    the dominant HBM writeback on v6e)."""
    B = x.shape[0]
    tb, Bp = _choose_batch_tiling(B, block_b, min_grid_steps)
    if Bp != B:
        x = jnp.pad(x, ((0, Bp - B), (0, 0)))
    grid = (Bp // tb,)

    args = (
        x,
        params["w1"], params["b1"],
        params["wva"], params["bva"],
        params["wval"], params["bval"],
        params["wadv"], params["badv"],
    )

    # Weights/biases: full-array blocks with a constant index_map -> fetched once,
    # VMEM-resident across all grid steps; x/q tiles are auto double-buffered.
    weight_specs = [_resident_spec(a.shape) for a in args[1:]]
    in_specs = [pl.BlockSpec((tb, N_STATE), lambda i: (i, 0))] + weight_specs
    out_specs = pl.BlockSpec((tb, N_ACTION), lambda i: (i, 0))

    flops = 2 * Bp * (N_STATE * H1 + H1 * H_VA + H_VALUE * V_OUT + H_ADV * N_ACTION)
    bytes_accessed = int(sum(int(a.nbytes) for a in args)
                         + Bp * N_ACTION * jnp.dtype(out_dtype).itemsize)

    out = pl.pallas_call(
        qnet_kernel,
        out_shape=jax.ShapeDtypeStruct((Bp, N_ACTION), out_dtype),
        grid_spec=pltpu.PrefetchScalarGridSpec(
            num_scalar_prefetch=0,
            grid=grid,
            in_specs=in_specs,
            out_specs=out_specs,
        ),
        compiler_params=pltpu.CompilerParams(
            dimension_semantics=("parallel",),        # batch tiles shard across TCs on v7x
            vmem_limit_bytes=vmem_limit_bytes,        # 48 MiB: safe on v7x (64 MiB physical)
        ),
        cost_estimate=pl.CostEstimate(
            flops=flops, transcendentals=0, bytes_accessed=bytes_accessed),
    )(*args)
    return out[:B]


def init_params(key):
    """Deterministic init mimicking PyTorch Linear default U(-1/sqrt(fan_in), +1/sqrt(fan_in)).
    Large weights are stored bf16 (DMA-bound kernel); tiny VPU-path weights stay f32."""
    def linear(key, fan_in, fan_out, w_dtype=jnp.float32):
        kw, kb = jax.random.split(key)
        bound = 1.0 / jnp.sqrt(float(fan_in))
        w = jax.random.uniform(kw, (fan_in, fan_out), jnp.float32, -bound, bound)
        b = jax.random.uniform(kb, (1, fan_out), jnp.float32, -bound, bound)
        return w.astype(w_dtype), b

    k1, k2, k3, k4, k5 = jax.random.split(key, 5)
    w1, b1 = linear(k1, N_STATE, H1)                               # f32 (VPU path, 2 KB)
    wv, bv = linear(k2, H1, H_VALUE, jnp.bfloat16)
    wa, ba = linear(k3, H1, H_ADV, jnp.bfloat16)
    wva = jnp.concatenate([wv, wa], axis=1)                        # (128, 768) bf16, fused
    bva = jnp.concatenate([bv, ba], axis=1)                        # (1, 768)   f32
    wval, bval = linear(k4, H_VALUE, V_OUT)                        # f32
    wval = wval.reshape(1, H_VALUE)                                # stored as (1, 256) row (VPU/XLU path)
    wadv, badv = linear(k5, H_ADV, N_ACTION, jnp.bfloat16)         # (512, 512) bf16
    return dict(w1=w1, b1=b1, wva=wva, bva=bva,
                wval=wval, bval=bval, wadv=wadv, badv=badv)


def qnetwork_ref(x, p):
    """Pure-JAX reference of the same forward (same bf16 weight rounding) for correctness."""
    y = jax.nn.relu(
        jnp.dot(x, p["w1"], precision=jax.lax.Precision.HIGHEST) + p["b1"])
    h = jax.nn.relu(
        jnp.dot(y.astype(jnp.bfloat16), p["wva"],
                preferred_element_type=jnp.float32) + p["bva"])
    v, a = h[:, :H_VALUE], h[:, H_VALUE:]
    val = jnp.sum(v * p["wval"], axis=-1, keepdims=True) + p["bval"]
    adv = jnp.dot(a.astype(jnp.bfloat16), p["wadv"],
                  preferred_element_type=jnp.float32) + p["badv"]
    return val + adv - jnp.mean(adv, axis=-1, keepdims=True)


if __name__ == "__main__":
    key = jax.random.PRNGKey(0)
    kx, kp = jax.random.split(key)

    batch = 16                      # small; exercises the 2-grid-step (megacore) path
    x = jax.random.normal(kx, (batch, N_STATE), jnp.float32)
    params = init_params(kp)

    q = jax.block_until_ready(qnetwork_forward(x, params))
    q_ref = jax.block_until_ready(qnetwork_ref(x, params))

    assert q.shape == (batch, N_ACTION)
    assert jnp.allclose(q, q_ref, atol=1e-2, rtol=1e-2), \
        "Pallas output mismatch vs JAX reference"

    print("KERNEL_OK")
</pallas_src>

<mosaic_0001>
module attributes {stable_mosaic.version = 11 : i64} {
  func.func @qnet_kernel(%arg0: i32, %arg1: memref<8x4xf32, #tpu.memory_space<vmem>>, %arg2: memref<4x128xf32, #tpu.memory_space<vmem>>, %arg3: memref<1x128xf32, #tpu.memory_space<vmem>>, %arg4: memref<128x768xbf16, #tpu.memory_space<vmem>>, %arg5: memref<1x768xf32, #tpu.memory_space<vmem>>, %arg6: memref<1x256xf32, #tpu.memory_space<vmem>>, %arg7: memref<1x1xf32, #tpu.memory_space<vmem>>, %arg8: memref<512x512xbf16, #tpu.memory_space<vmem>>, %arg9: memref<1x512xf32, #tpu.memory_space<vmem>>, %arg10: memref<8x512xf32, #tpu.memory_space<vmem>>) attributes {dimension_semantics = [#tpu.dimension_semantics<parallel>], iteration_bounds = array<i64: 2>, scalar_prefetch = 0 : i64, scratch_operands = 0 : i64, tpu.core_type = #tpu.core_type<tc>, window_params = [{transform_indices = @transform_0, window_bounds = array<i64: 8, 4>}, {pipeline_mode = #tpu.pipeline_mode<synchronous>, transform_indices = @transform_1, window_bounds = array<i64: 4, 128>}, {pipeline_mode = #tpu.pipeline_mode<synchronous>, transform_indices = @transform_2, window_bounds = array<i64: 1, 128>}, {pipeline_mode = #tpu.pipeline_mode<synchronous>, transform_indices = @transform_3, window_bounds = array<i64: 128, 768>}, {pipeline_mode = #tpu.pipeline_mode<synchronous>, transform_indices = @transform_4, window_bounds = array<i64: 1, 768>}, {pipeline_mode = #tpu.pipeline_mode<synchronous>, transform_indices = @transform_5, window_bounds = array<i64: 1, 256>}, {pipeline_mode = #tpu.pipeline_mode<synchronous>, transform_indices = @transform_6, window_bounds = array<i64: 1, 1>}, {pipeline_mode = #tpu.pipeline_mode<synchronous>, transform_indices = @transform_7, window_bounds = array<i64: 512, 512>}, {pipeline_mode = #tpu.pipeline_mode<synchronous>, transform_indices = @transform_8, window_bounds = array<i64: 1, 512>}, {transform_indices = @transform_9, window_bounds = array<i64: 8, 512>}]} {
    %c0 = arith.constant 0 : index
    %c0_0 = arith.constant 0 : index
    %0 = vector.load %arg1[%c0, %c0_0] : memref<8x4xf32, #tpu.memory_space<vmem>>, vector<8x4xf32>
    %c0_1 = arith.constant 0 : index
    %c0_2 = arith.constant 0 : index
    %1 = vector.load %arg2[%c0_1, %c0_2] : memref<4x128xf32, #tpu.memory_space<vmem>>, vector<4x128xf32>
    %c0_3 = arith.constant 0 : index
    %c0_4 = arith.constant 0 : index
    %2 = vector.load %arg3[%c0_3, %c0_4] : memref<1x128xf32, #tpu.memory_space<vmem>>, vector<1x128xf32>
    %3 = vector.extract_strided_slice %0 {offsets = [0, 0], sizes = [8, 1], strides = [1, 1]} : vector<8x4xf32> to vector<8x1xf32>
    %4 = vector.extract_strided_slice %1 {offsets = [0, 0], sizes = [1, 128], strides = [1, 1]} : vector<4x128xf32> to vector<1x128xf32>
    %5 = vector.broadcast %3 : vector<8x1xf32> to vector<8x128xf32>
    %6 = vector.broadcast %4 : vector<1x128xf32> to vector<8x128xf32>
    %7 = arith.mulf %5, %6 : vector<8x128xf32>
    %8 = vector.broadcast %2 : vector<1x128xf32> to vector<8x128xf32>
    %9 = arith.addf %8, %7 : vector<8x128xf32>
    %10 = vector.extract_strided_slice %0 {offsets = [0, 1], sizes = [8, 1], strides = [1, 1]} : vector<8x4xf32> to vector<8x1xf32>
    %11 = vector.extract_strided_slice %1 {offsets = [1, 0], sizes = [1, 128], strides = [1, 1]} : vector<4x128xf32> to vector<1x128xf32>
    %12 = vector.broadcast %10 : vector<8x1xf32> to vector<8x128xf32>
    %13 = vector.broadcast %11 : vector<1x128xf32> to vector<8x128xf32>
    %14 = arith.mulf %12, %13 : vector<8x128xf32>
    %15 = arith.addf %9, %14 : vector<8x128xf32>
    %16 = vector.extract_strided_slice %0 {offsets = [0, 2], sizes = [8, 1], strides = [1, 1]} : vector<8x4xf32> to vector<8x1xf32>
    %17 = vector.extract_strided_slice %1 {offsets = [2, 0], sizes = [1, 128], strides = [1, 1]} : vector<4x128xf32> to vector<1x128xf32>
    %18 = vector.broadcast %16 : vector<8x1xf32> to vector<8x128xf32>
    %19 = vector.broadcast %17 : vector<1x128xf32> to vector<8x128xf32>
    %20 = arith.mulf %18, %19 : vector<8x128xf32>
    %21 = arith.addf %15, %20 : vector<8x128xf32>
    %22 = vector.extract_strided_slice %0 {offsets = [0, 3], sizes = [8, 1], strides = [1, 1]} : vector<8x4xf32> to vector<8x1xf32>
    %23 = vector.extract_strided_slice %1 {offsets = [3, 0], sizes = [1, 128], strides = [1, 1]} : vector<4x128xf32> to vector<1x128xf32>
    %24 = vector.broadcast %22 : vector<8x1xf32> to vector<8x128xf32>
    %25 = vector.broadcast %23 : vector<1x128xf32> to vector<8x128xf32>
    %26 = arith.mulf %24, %25 : vector<8x128xf32>
    %27 = arith.addf %21, %26 : vector<8x128xf32>
    %cst = arith.constant 0.000000e+00 : f32
    %28 = vector.broadcast %cst : f32 to vector<8x128xf32>
    %29 = arith.maximumf %27, %28 : vector<8x128xf32>
    %30 = arith.truncf %29 : vector<8x128xf32> to vector<8x128xbf16>
    %c0_5 = arith.constant 0 : index
    %c0_6 = arith.constant 0 : index
    %31 = vector.load %arg4[%c0_5, %c0_6] : memref<128x768xbf16, #tpu.memory_space<vmem>>, vector<128x768xbf16>
    %cst_7 = arith.constant dense<0.000000e+00> : vector<8x768xf32>
    %32 = tpu.matmul %30, %31, %cst_7 {dimension_numbers = #tpu.dot_dimension_numbers<[1], [0], [0], [1], [0, 0, 1, 1], [], []>} : vector<8x128xbf16>, vector<128x768xbf16>, vector<8x768xf32> -> vector<8x768xf32>
    %c0_8 = arith.constant 0 : index
    %c0_9 = arith.constant 0 : index
    %33 = vector.load %arg5[%c0_8, %c0_9] : memref<1x768xf32, #tpu.memory_space<vmem>>, vector<1x768xf32>
    %34 = vector.broadcast %33 : vector<1x768xf32> to vector<8x768xf32>
    %35 = arith.addf %32, %34 : vector<8x768xf32>
    %cst_10 = arith.constant 0.000000e+00 : f32
    %36 = vector.broadcast %cst_10 : f32 to vector<8x768xf32>
    %37 = arith.maximumf %35, %36 : vector<8x768xf32>
    %38 = vector.extract_strided_slice %37 {offsets = [0, 0], sizes = [8, 256], strides = [1, 1]} : vector<8x768xf32> to vector<8x256xf32>
    %39 = vector.extract_strided_slice %37 {offsets = [0, 256], sizes = [8, 512], strides = [1, 1]} : vector<8x768xf32> to vector<8x512xf32>
    %c0_11 = arith.constant 0 : index
    %c0_12 = arith.constant 0 : index
    %40 = vector.load %arg6[%c0_11, %c0_12] : memref<1x256xf32, #tpu.memory_space<vmem>>, vector<1x256xf32>
    %41 = vector.broadcast %40 : vector<1x256xf32> to vector<8x256xf32>
    %42 = arith.mulf %38, %41 : vector<8x256xf32>
    %cst_13 = arith.constant dense<0.000000e+00> : vector<8xf32>
    %43 = vector.multi_reduction <add>, %42, %cst_13 [1] : vector<8x256xf32> to vector<8xf32>
    %44 = vector.shape_cast %43 : vector<8xf32> to vector<8x1xf32>
    %c0_14 = arith.constant 0 : index
    %c0_15 = arith.constant 0 : index
    %45 = vector.load %arg7[%c0_14, %c0_15] : memref<1x1xf32, #tpu.memory_space<vmem>>, vector<1x1xf32>
    %46 = vector.broadcast %45 : vector<1x1xf32> to vector<8x1xf32>
    %47 = arith.addf %44, %46 : vector<8x1xf32>
    %48 = arith.truncf %39 : vector<8x512xf32> to vector<8x512xbf16>
    %c0_16 = arith.constant 0 : index
    %c0_17 = arith.constant 0 : index
    %49 = vector.load %arg8[%c0_16, %c0_17] : memref<512x512xbf16, #tpu.memory_space<vmem>>, vector<512x512xbf16>
    %cst_18 = arith.constant dense<0.000000e+00> : vector<8x512xf32>
    %50 = tpu.matmul %48, %49, %cst_18 {dimension_numbers = #tpu.dot_dimension_numbers<[1], [0], [0], [1], [0, 0, 1, 1], [], []>} : vector<8x512xbf16>, vector<512x512xbf16>, vector<8x512xf32> -> vector<8x512xf32>
    %c0_19 = arith.constant 0 : index
    %c0_20 = arith.constant 0 : index
    %51 = vector.load %arg9[%c0_19, %c0_20] : memref<1x512xf32, #tpu.memory_space<vmem>>, vector<1x512xf32>
    %52 = vector.broadcast %51 : vector<1x512xf32> to vector<8x512xf32>
    %53 = arith.addf %50, %52 : vector<8x512xf32>
    %cst_21 = arith.constant dense<0.000000e+00> : vector<8xf32>
    %54 = vector.multi_reduction <add>, %53, %cst_21 [1] : vector<8x512xf32> to vector<8xf32>
    %55 = vector.shape_cast %54 : vector<8xf32> to vector<8x1xf32>
    %cst_22 = arith.constant 0.001953125 : f32
    %56 = vector.broadcast %cst_22 : f32 to vector<8x1xf32>
    %57 = arith.mulf %55, %56 : vector<8x1xf32>
    %58 = arith.subf %47, %57 : vector<8x1xf32>
    %59 = vector.broadcast %58 : vector<8x1xf32> to vector<8x512xf32>
    %60 = arith.addf %53, %59 : vector<8x512xf32>
    %c0_23 = arith.constant 0 : index
    %c0_24 = arith.constant 0 : index
    %61 = vector.load %arg10[%c0_23, %c0_24] : memref<8x512xf32, #tpu.memory_space<vmem>>, vector<8x512xf32>
    tpu.vector_store %arg10[%c0_23, %c0_24], %60 {strides = array<i32>} : memref<8x512xf32, #tpu.memory_space<vmem>>, vector<8x512xf32>,
    return
  }
  func.func @transform_0(%arg0: i32) -> (i32, i32) {
    %c0_i32 = arith.constant 0 : i32
    %c0_i32_0 = arith.constant 0 : i32
    return %arg0, %c0_i32 : i32, i32
  }
  func.func @transform_1(%arg0: i32) -> (i32, i32) {
    %c0_i32 = arith.constant 0 : i32
    %c0_i32_0 = arith.constant 0 : i32
    %c0_i32_1 = arith.constant 0 : i32
    return %c0_i32, %c0_i32_0 : i32, i32
  }
  func.func @transform_2(%arg0: i32) -> (i32, i32) {
    %c0_i32 = arith.constant 0 : i32
    %c0_i32_0 = arith.constant 0 : i32
    %c0_i32_1 = arith.constant 0 : i32
    return %c0_i32, %c0_i32_0 : i32, i32
  }
  func.func @transform_3(%arg0: i32) -> (i32, i32) {
    %c0_i32 = arith.constant 0 : i32
    %c0_i32_0 = arith.constant 0 : i32
    %c0_i32_1 = arith.constant 0 : i32
    return %c0_i32, %c0_i32_0 : i32, i32
  }
  func.func @transform_4(%arg0: i32) -> (i32, i32) {
    %c0_i32 = arith.constant 0 : i32
    %c0_i32_0 = arith.constant 0 : i32
    %c0_i32_1 = arith.constant 0 : i32
    return %c0_i32, %c0_i32_0 : i32, i32
  }
  func.func @transform_5(%arg0: i32) -> (i32, i32) {
    %c0_i32 = arith.constant 0 : i32
    %c0_i32_0 = arith.constant 0 : i32
    %c0_i32_1 = arith.constant 0 : i32
    return %c0_i32, %c0_i32_0 : i32, i32
  }
  func.func @transform_6(%arg0: i32) -> (i32, i32) {
    %c0_i32 = arith.constant 0 : i32
    %c0_i32_0 = arith.constant 0 : i32
    %c0_i32_1 = arith.constant 0 : i32
    return %c0_i32, %c0_i32_0 : i32, i32
  }
  func.func @transform_7(%arg0: i32) -> (i32, i32) {
    %c0_i32 = arith.constant 0 : i32
    %c0_i32_0 = arith.constant 0 : i32
    %c0_i32_1 = arith.constant 0 : i32
    return %c0_i32, %c0_i32_0 : i32, i32
  }
  func.func @transform_8(%arg0: i32) -> (i32, i32) {
    %c0_i32 = arith.constant 0 : i32
    %c0_i32_0 = arith.constant 0 : i32
    %c0_i32_1 = arith.constant 0 : i32
    return %c0_i32, %c0_i32_0 : i32, i32
  }
  func.func @transform_9(%arg0: i32) -> (i32, i32) {
    %c0_i32 = arith.constant 0 : i32
    %c0_i32_0 = arith.constant 0 : i32
    return %arg0, %c0_i32 : i32, i32
  }
}

</mosaic_0001>

<llo_original>
// kernel: tpu_custom_call.1
$region0: #{tpu_custom_call.1}
  #allocation0 [shape = 'u32[]', space=smem, size = 0x4, offset = 0x4, fixed_abs, tag = 'smem constant byte address 0x4 - core index']
  #allocation1 [shape = 'u32[72,128]{1,0:T(1,128)}', space=vmem, size = 0x9000, scoped, tag = 'internal scratch']
  #allocation2 [shape = 'f32[1,1]{1,0:T(1,128)S(1)}', space=vmem, size = 0x200, scoped, tag = 'scoped memory for tpu_custom_call.1']
  %s0 = inlined_call_operand.vmem [shape: f32[16,4], index: 0, kind: input, shape index: {}]
  %s1 = inlined_call_operand.vmem [shape: f32[4,128], index: 1, kind: input, shape index: {}]
  %s2 = inlined_call_operand.vmem [shape: f32[1,128], index: 2, kind: input, shape index: {}]
  %s3 = inlined_call_operand.hbm [shape: bf16[128,768], index: 3, kind: input, shape index: {}]
  %s4 = inlined_call_operand.vmem [shape: f32[1,768], index: 4, kind: input, shape index: {}]
  %s5 = inlined_call_operand.vmem [shape: f32[1,256], index: 5, kind: input, shape index: {}]
  %s6 = inlined_call_operand.<no memory space> [shape: f32[1,1], index: 6, kind: input, shape index: {}]
  %s7 = inlined_call_operand.hbm [shape: bf16[512,512], index: 7, kind: input, shape index: {}]
  %s8 = inlined_call_operand.vmem [shape: f32[1,512], index: 8, kind: input, shape index: {}]
  %s9 = inlined_call_operand.hbm [shape: f32[16,512], index: 9, kind: output, shape index: {}]
  %s10 = sld [smem:[#allocation0]]
  $region77: #{tpu_custom_call.1} parent=0
    _
  %s12 = ssub.s32 1, %s10
  %s13 = scalar_select 0, %s12, %s10
  %v14 = vstv %s6
  %15 = vst [vmem:[#allocation2] sm:$0x1] %v14
  $region1: #{tpu_custom_call.1} parent=0
    #allocation3 [shape = 'u8[196608]{0}', space=vmem, size = 0x30000, scoped, tag = 'input window, operand 3, single buffered']
    #allocation4 [shape = 's32[2]{0}', space=sflag, size = 0x8, scoped, tag = 'scoped memory for tpu_custom_call.1']
    #allocation5 [shape = 's32[2]{0}', space=sflag, size = 0x8, scoped, tag = 'scoped memory for tpu_custom_call.1']
    #allocation6 [shape = 'u8[524288]{0}', space=vmem, size = 0x80000, scoped, tag = 'input window, operand 7, single buffered']
    #allocation7 [shape = 's32[1]{0}', space=sflag, size = 0x4, scoped, tag = 'scoped memory for tpu_custom_call.1']
    #allocation8 [shape = 'u8[32768]{0}', space=vmem, size = 0x8000, scoped, tag = 'output window, operand 0']
    %16 = vsyncpa [#allocation4], 0
    %17 = vsyncpa [#allocation7], 0
    %18 = vsyncpa [#allocation5], 0
    %s19 = scalar_lea.sflag [#allocation5], 1
    %20 = vsyncpa %s19, 0
    loop: start=0, step=1, limit=4
    $region2: #{tpu_custom_call.1} parent=1 // loop_pre_header
      _
    $region3: #{tpu_custom_call.1} parent=1 // loop_header
      %s22 = sphi 0, %s26
      %p23 = scmp.ge.s32.totalorder %s22, 4
      %s32 = sphi 0, %s34
      %s35 = sphi 0, %s32
      %s36 = sphi 0, %s35
      %s52 = sphi 0, %s36
      %s56 = sphi 0, %s56
      %s58 = sphi 0, %s56
      %s59 = sphi 0, %s58
      %s73 = sphi 0, %s59
      %s77 = sphi 0, %s77
      %s79 = sphi 0, %s77
      %s80 = sphi 0, %s79
      %s94 = sphi 0, %s80
      %s98 = sphi 0, %s98
      %s100 = sphi 0, %s98
      %s101 = sphi 0, %s100
      %s115 = sphi 0, %s101
      %s119 = sphi 0, %s119
      %s121 = sphi 0, %s119
      %s122 = sphi 0, %s121
      %s136 = sphi 0, %s122
      %s140 = sphi 0, %s140
      %s142 = sphi 0, %s140
      %s143 = sphi 0, %s142
      %s157 = sphi 0, %s143
      %s161 = sphi 0, %s161
      %s163 = sphi 0, %s161
      %s164 = sphi 0, %s163
      %s178 = sphi 0, %s164
      %s182 = sphi 0, %s182
      %s184 = sphi 0, %s182
      %s185 = sphi 0, %s184
      %s199 = sphi 0, %s185
      %s203 = sphi 0, %s203
      %s205 = sphi 0, %s203
      %s206 = sphi 0, %s205
      %s220 = sphi 0, %s206
      %s226 = sphi 0, %s228
      %s229 = sphi 0, %s226
      %s230 = sphi 0, %s229
      %s246 = sphi 0, %s230
    $region4: #{tpu_custom_call.1} parent=1 // loop_header_branch
      %25 = sbr.rel (%p23) target = $region8
    $region5: #{tpu_custom_call.1} parent=1 // loop_body
      %s27 = ssub.s32 %s22, 1
      %s28 = ssub.s32 %s22, 2
      %s29 = sadd.s32 %s22, 1
      %s30 = ssub.s32 %s22, %s29
      %p31 = scmp.eq.s32.totalorder %s30, 0
      %s33 = sadd.s32 %s32, 1
      %s34 = scalar_select %p31, %s32, %s33
      %p37 = pneg %p31
      %p38 = scmp.eq.s32.totalorder %s22, 1
      %p39 = por %p37, %p38
      %p40 = scmp.ne.s32.totalorder %s32, %s35
      %p41 = scmp.eq.s32.totalorder %s22, 0
      %p42 = por %p40, %p41
      %p43 = scmp.ne.s32.totalorder %s32, %s35
      %p44 = scmp.eq.s32.totalorder %s27, 1
      %p45 = por %p43, %p44
      %p46 = scmp.ne.s32.totalorder %s35, %s36
      %p47 = scmp.eq.s32.totalorder %s27, 0
      %p48 = por %p46, %p47
      %p49 = scmp.ne.s32.totalorder %s35, %s36
      %p50 = scmp.eq.s32.totalorder %s28, 1
      %p51 = por %p49, %p50
      %p53 = scmp.ne.s32.totalorder %s36, %s52
      %p54 = scmp.eq.s32.totalorder %s28, 0
      %p55 = por %p53, %p54
      %s57 = sadd.s32 %s56, 1
      %p60 = scmp.eq.s32.totalorder %s22, 1
      %p61 = scmp.ne.s32.totalorder %s56, %s58
      %p62 = scmp.eq.s32.totalorder %s22, 0
      %p63 = por %p61, %p62
      %p64 = scmp.ne.s32.totalorder %s56, %s58
      %p65 = scmp.eq.s32.totalorder %s27, 1
      %p66 = por %p64, %p65
      %p67 = scmp.ne.s32.totalorder %s58, %s59
      %p68 = scmp.eq.s32.totalorder %s27, 0
      %p69 = por %p67, %p68
      %p70 = scmp.ne.s32.totalorder %s58, %s59
      %p71 = scmp.eq.s32.totalorder %s28, 1
      %p72 = por %p70, %p71
      %p74 = scmp.ne.s32.totalorder %s59, %s73
      %p75 = scmp.eq.s32.totalorder %s28, 0
      %p76 = por %p74, %p75
      %s78 = sadd.s32 %s77, 1
      %p81 = scmp.eq.s32.totalorder %s22, 1
      %p82 = scmp.ne.s32.totalorder %s77, %s79
      %p83 = scmp.eq.s32.totalorder %s22, 0
      %p84 = por %p82, %p83
      %p85 = scmp.ne.s32.totalorder %s77, %s79
      %p86 = scmp.eq.s32.totalorder %s27, 1
      %p87 = por %p85, %p86
      %p88 = scmp.ne.s32.totalorder %s79, %s80
      %p89 = scmp.eq.s32.totalorder %s27, 0
      %p90 = por %p88, %p89
      %p91 = scmp.ne.s32.totalorder %s79, %s80
      %p92 = scmp.eq.s32.totalorder %s28, 1
      %p93 = por %p91, %p92
      %p95 = scmp.ne.s32.totalorder %s80, %s94
      %p96 = scmp.eq.s32.totalorder %s28, 0
      %p97 = por %p95, %p96
      %s99 = sadd.s32 %s98, 1
      %p102 = scmp.eq.s32.totalorder %s22, 1
      %p103 = scmp.ne.s32.totalorder %s98, %s100
      %p104 = scmp.eq.s32.totalorder %s22, 0
      %p105 = por %p103, %p104
      %p106 = scmp.ne.s32.totalorder %s98, %s100
      %p107 = scmp.eq.s32.totalorder %s27, 1
      %p108 = por %p106, %p107
      %p109 = scmp.ne.s32.totalorder %s100, %s101
      %p110 = scmp.eq.s32.totalorder %s27, 0
      %p111 = por %p109, %p110
      %p112 = scmp.ne.s32.totalorder %s100, %s101
      %p113 = scmp.eq.s32.totalorder %s28, 1
      %p114 = por %p112, %p113
      %p116 = scmp.ne.s32.totalorder %s101, %s115
      %p117 = scmp.eq.s32.totalorder %s28, 0
      %p118 = por %p116, %p117
      %s120 = sadd.s32 %s119, 1
      %p123 = scmp.eq.s32.totalorder %s22, 1
      %p124 = scmp.ne.s32.totalorder %s119, %s121
      %p125 = scmp.eq.s32.totalorder %s22, 0
      %p126 = por %p124, %p125
      %p127 = scmp.ne.s32.totalorder %s119, %s121
      %p128 = scmp.eq.s32.totalorder %s27, 1
      %p129 = por %p127, %p128
      %p130 = scmp.ne.s32.totalorder %s121, %s122
      %p131 = scmp.eq.s32.totalorder %s27, 0
      %p132 = por %p130, %p131
      %p133 = scmp.ne.s32.totalorder %s121, %s122
      %p134 = scmp.eq.s32.totalorder %s28, 1
      %p135 = por %p133, %p134
      %p137 = scmp.ne.s32.totalorder %s122, %s136
      %p138 = scmp.eq.s32.totalorder %s28, 0
      %p139 = por %p137, %p138
      %s141 = sadd.s32 %s140, 1
      %p144 = scmp.eq.s32.totalorder %s22, 1
      %p145 = scmp.ne.s32.totalorder %s140, %s142
      %p146 = scmp.eq.s32.totalorder %s22, 0
      %p147 = por %p145, %p146
      %p148 = scmp.ne.s32.totalorder %s140, %s142
      %p149 = scmp.eq.s32.totalorder %s27, 1
      %p150 = por %p148, %p149
      %p151 = scmp.ne.s32.totalorder %s142, %s143
      %p152 = scmp.eq.s32.totalorder %s27, 0
      %p153 = por %p151, %p152
      %p154 = scmp.ne.s32.totalorder %s142, %s143
      %p155 = scmp.eq.s32.totalorder %s28, 1
      %p156 = por %p154, %p155
      %p158 = scmp.ne.s32.totalorder %s143, %s157
      %p159 = scmp.eq.s32.totalorder %s28, 0
      %p160 = por %p158, %p159
      %s162 = sadd.s32 %s161, 1
      %p165 = scmp.eq.s32.totalorder %s22, 1
      %p166 = scmp.ne.s32.totalorder %s161, %s163
      %p167 = scmp.eq.s32.totalorder %s22, 0
      %p168 = por %p166, %p167
      %p169 = scmp.ne.s32.totalorder %s161, %s163
      %p170 = scmp.eq.s32.totalorder %s27, 1
      %p171 = por %p169, %p170
      %p172 = scmp.ne.s32.totalorder %s163, %s164
      %p173 = scmp.eq.s32.totalorder %s27, 0
      %p174 = por %p172, %p173
      %p175 = scmp.ne.s32.totalorder %s163, %s164
      %p176 = scmp.eq.s32.totalorder %s28, 1
      %p177 = por %p175, %p176
      %p179 = scmp.ne.s32.totalorder %s164, %s178
      %p180 = scmp.eq.s32.totalorder %s28, 0
      %p181 = por %p179, %p180
      %s183 = sadd.s32 %s182, 1
      %p186 = scmp.eq.s32.totalorder %s22, 1
      %p187 = scmp.ne.s32.totalorder %s182, %s184
      %p188 = scmp.eq.s32.totalorder %s22, 0
      %p189 = por %p187, %p188
      %p190 = scmp.ne.s32.totalorder %s182, %s184
      %p191 = scmp.eq.s32.totalorder %s27, 1
      %p192 = por %p190, %p191
      %p193 = scmp.ne.s32.totalorder %s184, %s185
      %p194 = scmp.eq.s32.totalorder %s27, 0
      %p195 = por %p193, %p194
      %p196 = scmp.ne.s32.totalorder %s184, %s185
      %p197 = scmp.eq.s32.totalorder %s28, 1
      %p198 = por %p196, %p197
      %p200 = scmp.ne.s32.totalorder %s185, %s199
      %p201 = scmp.eq.s32.totalorder %s28, 0
      %p202 = por %p200, %p201
      %s204 = sadd.s32 %s203, 1
      %p207 = scmp.eq.s32.totalorder %s22, 1
      %p208 = scmp.ne.s32.totalorder %s203, %s205
      %p209 = scmp.eq.s32.totalorder %s22, 0
      %p210 = por %p208, %p209
      %p211 = scmp.ne.s32.totalorder %s203, %s205
      %p212 = scmp.eq.s32.totalorder %s27, 1
      %p213 = por %p211, %p212
      %p214 = scmp.ne.s32.totalorder %s205, %s206
      %p215 = scmp.eq.s32.totalorder %s27, 0
      %p216 = por %p214, %p215
      %p217 = scmp.ne.s32.totalorder %s205, %s206
      %p218 = scmp.eq.s32.totalorder %s28, 1
      %p219 = por %p217, %p218
      %p221 = scmp.ne.s32.totalorder %s206, %s220
      %p222 = scmp.eq.s32.totalorder %s28, 0
      %p223 = por %p221, %p222
      %s224 = ssub.s32 %s22, %s29
      %p225 = scmp.eq.s32.totalorder %s224, 0
      %s227 = sadd.s32 %s226, 1
      %s228 = scalar_select %p225, %s226, %s227
      %p231 = pneg %p225
      %p232 = scmp.eq.s32.totalorder %s22, 1
      %p233 = por %p231, %p232
      %p234 = scmp.ne.s32.totalorder %s226, %s229
      %p235 = scmp.eq.s32.totalorder %s22, 0
      %p236 = por %p234, %p235
      %p237 = scmp.ne.s32.totalorder %s226, %s229
      %p238 = scmp.eq.s32.totalorder %s27, 1
      %p239 = por %p237, %p238
      %p240 = scmp.ne.s32.totalorder %s229, %s230
      %p241 = scmp.eq.s32.totalorder %s27, 0
      %p242 = por %p240, %p241
      %p243 = scmp.ne.s32.totalorder %s229, %s230
      %p244 = scmp.eq.s32.totalorder %s28, 1
      %p245 = por %p243, %p244
      %p247 = scmp.ne.s32.totalorder %s230, %s246
      %p248 = scmp.eq.s32.totalorder %s28, 0
      %p249 = por %p247, %p248
      %p250 = scmp.le.s32.totalorder 1, %s22
      %p251 = scmp.lt.s32.totalorder %s22, 3
      %p252 = pnand %p250, %p251
      %p253 = pneg %p252
      // Predicated region
      $region9: #{tpu_custom_call.1} parent=5 // pred_check
        _
      $region10: #{tpu_custom_call.1} parent=5 // pred_check_branch
        %255 = sbr.rel (%p252) target = $region12
      $region11: #{tpu_custom_call.1} parent=5 // pred_region
        %s256 = ssub.s32 %s22, 1
        // Predicated region
        $region13: #{tpu_custom_call.1} parent=11 // pred_check
          %p257 = pneg %p69
        $region14: #{tpu_custom_call.1} parent=11 // pred_check_branch
          %259 = sbr.rel (%p257) target = $region16
        $region15: #{tpu_custom_call.1} parent=11 // pred_region
          _
        $region16: #{tpu_custom_call.1} parent=11 // pred_fallthru
          _
        // Predicated region
        $region17: #{tpu_custom_call.1} parent=11 // pred_check
          %p260 = pneg %p90
        $region18: #{tpu_custom_call.1} parent=11 // pred_check_branch
          %262 = sbr.rel (%p260) target = $region20
        $region19: #{tpu_custom_call.1} parent=11 // pred_region
          _
        $region20: #{tpu_custom_call.1} parent=11 // pred_fallthru
          _
        // Predicated region
        $region21: #{tpu_custom_call.1} parent=11 // pred_check
          %p263 = pneg %p111
        $region22: #{tpu_custom_call.1} parent=11 // pred_check_branch
          %265 = sbr.rel (%p263) target = $region24
        $region23: #{tpu_custom_call.1} parent=11 // pred_region
          %267 = vsyncadd [#allocation4], 0
          %s268 = sshll.u32 %s3, 4
          %s269 = int_to_ptr.hbm [resolvable:$true] %s268
          %s270 = sshll.u32 [#allocation3], 4
          %s271 = int_to_ptr.vmem [resolvable:$true] %s270
          %276 = dma.hbm_to_vmem [thread:$0]  %s269, 6144, %s271, [#allocation4], 384, 384, 24
        $region24: #{tpu_custom_call.1} parent=11 // pred_fallthru
          _
        // Predicated region
        $region25: #{tpu_custom_call.1} parent=11 // pred_check
          %p277 = pneg %p132
        $region26: #{tpu_custom_call.1} parent=11 // pred_check_branch
          %279 = sbr.rel (%p277) target = $region28
        $region27: #{tpu_custom_call.1} parent=11 // pred_region
          _
        $region28: #{tpu_custom_call.1} parent=11 // pred_fallthru
          _
        // Predicated region
        $region29: #{tpu_custom_call.1} parent=11 // pred_check
          %p280 = pneg %p153
        $region30: #{tpu_custom_call.1} parent=11 // pred_check_branch
          %282 = sbr.rel (%p280) target = $region32
        $region31: #{tpu_custom_call.1} parent=11 // pred_region
          _
        $region32: #{tpu_custom_call.1} parent=11 // pred_fallthru
          _
        // Predicated region
        $region33: #{tpu_custom_call.1} parent=11 // pred_check
          %p283 = pneg %p174
        $region34: #{tpu_custom_call.1} parent=11 // pred_check_branch
          %285 = sbr.rel (%p283) target = $region36
        $region35: #{tpu_custom_call.1} parent=11 // pred_region
          _
        $region36: #{tpu_custom_call.1} parent=11 // pred_fallthru
          _
        // Predicated region
        $region37: #{tpu_custom_call.1} parent=11 // pred_check
          %p286 = pneg %p195
        $region38: #{tpu_custom_call.1} parent=11 // pred_check_branch
          %288 = sbr.rel (%p286) target = $region40
        $region39: #{tpu_custom_call.1} parent=11 // pred_region
          %290 = vsyncadd [#allocation7], 0
          %s291 = sshll.u32 %s7, 4
          %s292 = int_to_ptr.hbm [resolvable:$true] %s291
          %s293 = sshll.u32 [#allocation6], 4
          %s294 = int_to_ptr.vmem [resolvable:$true] %s293
          %299 = dma.hbm_to_vmem [thread:$0]  %s292, 16384, %s294, [#allocation7], 256, 256, 16
        $region40: #{tpu_custom_call.1} parent=11 // pred_fallthru
          _
        // Predicated region
        $region41: #{tpu_custom_call.1} parent=11 // pred_check
          %p300 = pneg %p216
        $region42: #{tpu_custom_call.1} parent=11 // pred_check_branch
          %302 = sbr.rel (%p300) target = $region44
        $region43: #{tpu_custom_call.1} parent=11 // pred_region
          _
        $region44: #{tpu_custom_call.1} parent=11 // pred_fallthru
          _
      $region12: #{tpu_custom_call.1} parent=5 // pred_fallthru
        _
      %p303 = scmp.lt.s32.totalorder %s22, 2
      // Predicated region
      $region45: #{tpu_custom_call.1} parent=5 // pred_check
        %p304 = pneg %p303
      $region46: #{tpu_custom_call.1} parent=5 // pred_check_branch
        %306 = sbr.rel (%p304) target = $region48
      $region47: #{tpu_custom_call.1} parent=5 // pred_region
        // Predicated region
        $region49: #{tpu_custom_call.1} parent=47 // pred_check
          %p307 = pneg %p42
        $region50: #{tpu_custom_call.1} parent=47 // pred_check_branch
          %309 = sbr.rel (%p307) target = $region52
        $region51: #{tpu_custom_call.1} parent=47 // pred_region
          %p310 = scmp.lt.s32.totalorder %s22, 1
          %s311 = scalar_select %p310, %s22, 1
          %s312 = smul.addr %s311, 8
          %s313 = scalar_lea.vmem %s0, %s312
        $region52: #{tpu_custom_call.1} parent=47 // pred_fallthru
          _
      $region48: #{tpu_custom_call.1} parent=5 // pred_fallthru
        _
      %p314 = scmp.le.s32.totalorder 1, %s22
      %p315 = scmp.lt.s32.totalorder %s22, 3
      %p316 = pnand %p314, %p315
      %p317 = pneg %p316
      // Predicated region
      $region53: #{tpu_custom_call.1} parent=5 // pred_check
        _
      $region54: #{tpu_custom_call.1} parent=5 // pred_check_branch
        %319 = sbr.rel (%p316) target = $region56
      $region55: #{tpu_custom_call.1} parent=5 // pred_region
        %s320 = ssub.s32 %s22, 1
        // Predicated region
        $region57: #{tpu_custom_call.1} parent=55 // pred_check
          %p321 = pneg %p111
        $region58: #{tpu_custom_call.1} parent=55 // pred_check_branch
          %323 = sbr.rel (%p321) target = $region60
        $region59: #{tpu_custom_call.1} parent=55 // pred_region
          %325 = dma.done [#allocation4], 6144
        $region60: #{tpu_custom_call.1} parent=55 // pred_fallthru
          _
        // Predicated region
        $region61: #{tpu_custom_call.1} parent=55 // pred_check
          %p326 = pneg %p195
        $region62: #{tpu_custom_call.1} parent=55 // pred_check_branch
          %328 = sbr.rel (%p326) target = $region64
        $region63: #{tpu_custom_call.1} parent=55 // pred_region
          %330 = dma.done [#allocation7], 16384
        $region64: #{tpu_custom_call.1} parent=55 // pred_fallthru
          _
        %p331 = scmp.lt.s32.totalorder %s27, 1
        %s332 = scalar_select %p331, %s27, 1
        %s333 = smul.addr %s332, 8
        %s334 = scalar_lea.vmem %s0, %s333
        %p335 = pneg %p48
        %p336 = pneg %p45
        %p337 = pneg %p69
        %p338 = pneg %p66
        %p339 = pneg %p90
        %p340 = pneg %p87
        %p341 = pneg %p111
        %p342 = pneg %p108
        %p343 = pneg %p132
        %p344 = pneg %p129
        %p345 = pneg %p153
        %p346 = pneg %p150
        %p347 = pneg %p174
        %p348 = pneg %p171
        %p349 = pneg %p195
        %p350 = pneg %p192
        %p351 = pneg %p216
        %p352 = pneg %p213
        %p353 = pneg %p242
        %p354 = pneg %p239
        %s355 = sand.u32 %s229, 1
        %s356 = scalar_lea.sflag [#allocation5], %s355
        %s357 = sand.u32 %s229, 1
        %s358 = smul.addr %s357, 32
        %s359 = scalar_lea.vmem [#allocation8], %s358
        %p360 = scmp.lt.s32.totalorder %s27, 1
        %s361 = scalar_select %p360, %s27, 1
        %s362 = smul.addr %s361, 8
        %s363 = scalar_lea.vmem %s0, %s362
        %v364 = vld [vmem:[%s363] sm:$0xff]
        %v365 = vld [vmem:[%s1] sm:$0xf]
        %v366 = vld [vmem:[%s2] sm:$0x1]
        %368 = vset.pattern.permute.xlu0 0
        %369 = vperm.xlu0 %368, %v364
        %v370 = vpop.permute.xlu0 %369
        %v372 = vperm.slane %v365, 0
        %v373 = vmul.f32 %v370, %v372
        %v375 = vperm.slane %v366, 0
        %v377 = vadd.f32 %v375, %v373
        %378 = vset.pattern.permute.xlu0 1
        %379 = vperm.xlu0 %378, %v364
        %v380 = vpop.permute.xlu0 %379
        %v382 = vperm.slane %v365, 1
        %v383 = vmul.f32 %v380, %v382
        %v384 = vadd.f32 %v377, %v383
        %385 = vset.pattern.permute.xlu0 2
        %386 = vperm.xlu0 %385, %v364
        %v387 = vpop.permute.xlu0 %386
        %v389 = vperm.slane %v365, 2
        %v390 = vmul.f32 %v387, %v389
        %v391 = vadd.f32 %v384, %v390
        %392 = vset.pattern.permute.xlu0 3
        %393 = vperm.xlu0 %392, %v364
        %v394 = vpop.permute.xlu0 %393
        %v396 = vperm.slane %v365, 3
        %v397 = vmul.f32 %v394, %v396
        %v398 = vadd.f32 %v391, %v397
        %v399 = vmax.f32 %v398, 0.0
        %v400 = vpack.c.bf16 %v399, %v399
        %v401 = vld [vmem:[#allocation3] sm:$0xff]
        %v402 = vld [vmem:[#allocation3 + $0x8] sm:$0xff]
        %v403 = vld [vmem:[#allocation3 + $0x10] sm:$0xff]
        %v404 = vld [vmem:[#allocation3 + $0x18] sm:$0xff]
        %v405 = vld [vmem:[#allocation3 + $0x20] sm:$0xff]
        %v406 = vld [vmem:[#allocation3 + $0x28] sm:$0xff]
        %v407 = vld [vmem:[#allocation3 + $0x30] sm:$0xff]
        %v408 = vld [vmem:[#allocation3 + $0x38] sm:$0xff]
        %v409 = vld [vmem:[#allocation3 + $0x40] sm:$0xff]
        %v410 = vld [vmem:[#allocation3 + $0x48] sm:$0xff]
        %v411 = vld [vmem:[#allocation3 + $0x50] sm:$0xff]
        %v412 = vld [vmem:[#allocation3 + $0x58] sm:$0xff]
        %v413 = vld [vmem:[#allocation3 + $0x60] sm:$0xff]
        %v414 = vld [vmem:[#allocation3 + $0x68] sm:$0xff]
        %v415 = vld [vmem:[#allocation3 + $0x70] sm:$0xff]
        %v416 = vld [vmem:[#allocation3 + $0x78] sm:$0xff]
        %v417 = vld [vmem:[#allocation3 + $0x80] sm:$0xff]
        %v418 = vld [vmem:[#allocation3 + $0x88] sm:$0xff]
        %v419 = vld [vmem:[#allocation3 + $0x90] sm:$0xff]
        %v420 = vld [vmem:[#allocation3 + $0x98] sm:$0xff]
        %v421 = vld [vmem:[#allocation3 + $0xa0] sm:$0xff]
        %v422 = vld [vmem:[#allocation3 + $0xa8] sm:$0xff]
        %v423 = vld [vmem:[#allocation3 + $0xb0] sm:$0xff]
        %v424 = vld [vmem:[#allocation3 + $0xb8] sm:$0xff]
        %v425 = vld [vmem:[#allocation3 + $0xc0] sm:$0xff]
        %v426 = vld [vmem:[#allocation3 + $0xc8] sm:$0xff]
        %v427 = vld [vmem:[#allocation3 + $0xd0] sm:$0xff]
        %v428 = vld [vmem:[#allocation3 + $0xd8] sm:$0xff]
        %v429 = vld [vmem:[#allocation3 + $0xe0] sm:$0xff]
        %v430 = vld [vmem:[#allocation3 + $0xe8] sm:$0xff]
        %v431 = vld [vmem:[#allocation3 + $0xf0] sm:$0xff]
        %v432 = vld [vmem:[#allocation3 + $0xf8] sm:$0xff]
        %v433 = vld [vmem:[#allocation3 + $0x100] sm:$0xff]
        %v434 = vld [vmem:[#allocation3 + $0x108] sm:$0xff]
        %v435 = vld [vmem:[#allocation3 + $0x110] sm:$0xff]
        %v436 = vld [vmem:[#allocation3 + $0x118] sm:$0xff]
        %v437 = vld [vmem:[#allocation3 + $0x120] sm:$0xff]
        %v438 = vld [vmem:[#allocation3 + $0x128] sm:$0xff]
        %v439 = vld [vmem:[#allocation3 + $0x130] sm:$0xff]
        %v440 = vld [vmem:[#allocation3 + $0x138] sm:$0xff]
        %v441 = vld [vmem:[#allocation3 + $0x140] sm:$0xff]
        %v442 = vld [vmem:[#allocation3 + $0x148] sm:$0xff]
        %v443 = vld [vmem:[#allocation3 + $0x150] sm:$0xff]
        %v444 = vld [vmem:[#allocation3 + $0x158] sm:$0xff]
        %v445 = vld [vmem:[#allocation3 + $0x160] sm:$0xff]
        %v446 = vld [vmem:[#allocation3 + $0x168] sm:$0xff]
        %v447 = vld [vmem:[#allocation3 + $0x170] sm:$0xff]
        %v448 = vld [vmem:[#allocation3 + $0x178] sm:$0xff]
        %v449 = vld [vmem:[%s4] sm:$0x3f]
        %v451 = vperm.slane %v449, 0
        %v452 = vperm.slane %v449, 1
        %v453 = vperm.slane %v449, 2
        %v454 = vperm.slane %v449, 3
        %v455 = vperm.slane %v449, 4
        %v456 = vperm.slane %v449, 5
        %v511 = vunpack.c.l.b16 %v401
        %v512 = vunpack.c.h.b16 %v401
        %v513 = vunpack.c.l.b16 %v402
        %v514 = vunpack.c.h.b16 %v402
        %v515 = vunpack.c.l.b16 %v403
        %v516 = vunpack.c.h.b16 %v403
        %v517 = vunpack.c.l.b16 %v404
        %v518 = vunpack.c.h.b16 %v404
        %v519 = vunpack.c.l.b16 %v405
        %v520 = vunpack.c.h.b16 %v405
        %v521 = vunpack.c.l.b16 %v406
        %v522 = vunpack.c.h.b16 %v406
        %v523 = vunpack.c.l.b16 %v407
        %v524 = vunpack.c.h.b16 %v407
        %v525 = vunpack.c.l.b16 %v408
        %v526 = vunpack.c.h.b16 %v408
        %v527 = vunpack.c.l.b16 %v409
        %v528 = vunpack.c.h.b16 %v409
        %v529 = vunpack.c.l.b16 %v410
        %v530 = vunpack.c.h.b16 %v410
        %v531 = vunpack.c.l.b16 %v411
        %v532 = vunpack.c.h.b16 %v411
        %v533 = vunpack.c.l.b16 %v412
        %v534 = vunpack.c.h.b16 %v412
        %v535 = vunpack.c.l.b16 %v413
        %v536 = vunpack.c.h.b16 %v413
        %v537 = vunpack.c.l.b16 %v414
        %v538 = vunpack.c.h.b16 %v414
        %v539 = vunpack.c.l.b16 %v415
        %v540 = vunpack.c.h.b16 %v415
        %v541 = vunpack.c.l.b16 %v416
        %v542 = vunpack.c.h.b16 %v416
        %v543 = vunpack.c.l.b16 %v417
        %v544 = vunpack.c.h.b16 %v417
        %v545 = vunpack.c.l.b16 %v418
        %v546 = vunpack.c.h.b16 %v418
        %v547 = vunpack.c.l.b16 %v419
        %v548 = vunpack.c.h.b16 %v419
        %v549 = vunpack.c.l.b16 %v420
        %v550 = vunpack.c.h.b16 %v420
        %v551 = vunpack.c.l.b16 %v421
        %v552 = vunpack.c.h.b16 %v421
        %v553 = vunpack.c.l.b16 %v422
        %v554 = vunpack.c.h.b16 %v422
        %v555 = vunpack.c.l.b16 %v423
        %v556 = vunpack.c.h.b16 %v423
        %v557 = vunpack.c.l.b16 %v424
        %v558 = vunpack.c.h.b16 %v424
        %v559 = vunpack.c.l.b16 %v425
        %v560 = vunpack.c.h.b16 %v425
        %v561 = vunpack.c.l.b16 %v426
        %v562 = vunpack.c.h.b16 %v426
        %v563 = vunpack.c.l.b16 %v427
        %v564 = vunpack.c.h.b16 %v427
        %v565 = vunpack.c.l.b16 %v428
        %v566 = vunpack.c.h.b16 %v428
        %v567 = vunpack.c.l.b16 %v429
        %v568 = vunpack.c.h.b16 %v429
        %v569 = vunpack.c.l.b16 %v430
        %v570 = vunpack.c.h.b16 %v430
        %v571 = vunpack.c.l.b16 %v431
        %v572 = vunpack.c.h.b16 %v431
        %v573 = vunpack.c.l.b16 %v432
        %v574 = vunpack.c.h.b16 %v432
        %v575 = vunpack.c.l.b16 %v433
        %v576 = vunpack.c.h.b16 %v433
        %v577 = vunpack.c.l.b16 %v434
        %v578 = vunpack.c.h.b16 %v434
        %v579 = vunpack.c.l.b16 %v435
        %v580 = vunpack.c.h.b16 %v435
        %v581 = vunpack.c.l.b16 %v436
        %v582 = vunpack.c.h.b16 %v436
        %v583 = vunpack.c.l.b16 %v437
        %v584 = vunpack.c.h.b16 %v437
        %v585 = vunpack.c.l.b16 %v438
        %v586 = vunpack.c.h.b16 %v438
        %v587 = vunpack.c.l.b16 %v439
        %v588 = vunpack.c.h.b16 %v439
        %v589 = vunpack.c.l.b16 %v440
        %v590 = vunpack.c.h.b16 %v440
        %v591 = vunpack.c.l.b16 %v441
        %v592 = vunpack.c.h.b16 %v441
        %v593 = vunpack.c.l.b16 %v442
        %v594 = vunpack.c.h.b16 %v442
        %v595 = vunpack.c.l.b16 %v443
        %v596 = vunpack.c.h.b16 %v443
        %v597 = vunpack.c.l.b16 %v444
        %v598 = vunpack.c.h.b16 %v444
        %v599 = vunpack.c.l.b16 %v445
        %v600 = vunpack.c.h.b16 %v445
        %v601 = vunpack.c.l.b16 %v446
        %v602 = vunpack.c.h.b16 %v446
        %v603 = vunpack.c.l.b16 %v447
        %v604 = vunpack.c.h.b16 %v447
        %v605 = vunpack.c.l.b16 %v448
        %v606 = vunpack.c.h.b16 %v448
        %v607 = vpack.c.b16 %v517, %v511
        %v608 = vpack.c.b16 %v518, %v512
        %v609 = vpack.c.b16 %v519, %v513
        %v610 = vpack.c.b16 %v520, %v514
        %v611 = vpack.c.b16 %v521, %v515
        %v612 = vpack.c.b16 %v522, %v516
        %v613 = vpack.c.b16 %v529, %v523
        %v614 = vpack.c.b16 %v530, %v524
        %v615 = vpack.c.b16 %v531, %v525
        %v616 = vpack.c.b16 %v532, %v526
        %v617 = vpack.c.b16 %v533, %v527
        %v618 = vpack.c.b16 %v534, %v528
        %v619 = vpack.c.b16 %v541, %v535
        %v620 = vpack.c.b16 %v542, %v536
        %v621 = vpack.c.b16 %v543, %v537
        %v622 = vpack.c.b16 %v544, %v538
        %v623 = vpack.c.b16 %v545, %v539
        %v624 = vpack.c.b16 %v546, %v540
        %v625 = vpack.c.b16 %v553, %v547
        %v626 = vpack.c.b16 %v554, %v548
        %v627 = vpack.c.b16 %v555, %v549
        %v628 = vpack.c.b16 %v556, %v550
        %v629 = vpack.c.b16 %v557, %v551
        %v630 = vpack.c.b16 %v558, %v552
        %v631 = vpack.c.b16 %v565, %v559
        %v632 = vpack.c.b16 %v566, %v560
        %v633 = vpack.c.b16 %v567, %v561
        %v634 = vpack.c.b16 %v568, %v562
        %v635 = vpack.c.b16 %v569, %v563
        %v636 = vpack.c.b16 %v570, %v564
        %v637 = vpack.c.b16 %v577, %v571
        %v638 = vpack.c.b16 %v578, %v572
        %v639 = vpack.c.b16 %v579, %v573
        %v640 = vpack.c.b16 %v580, %v574
        %v641 = vpack.c.b16 %v581, %v575
        %v642 = vpack.c.b16 %v582, %v576
        %v643 = vpack.c.b16 %v589, %v583
        %v644 = vpack.c.b16 %v590, %v584
        %v645 = vpack.c.b16 %v591, %v585
        %v646 = vpack.c.b16 %v592, %v586
        %v647 = vpack.c.b16 %v593, %v587
        %v648 = vpack.c.b16 %v594, %v588
        %v649 = vpack.c.b16 %v601, %v595
        %v650 = vpack.c.b16 %v602, %v596
        %v651 = vpack.c.b16 %v603, %v597
        %v652 = vpack.c.b16 %v604, %v598
        %v653 = vpack.c.b16 %v605, %v599
        %v654 = vpack.c.b16 %v606, %v600
        %703 = vmatpush.bf16.msra.mxu0 %v649
        %704 = vmatpush.bf16.msra.mxu0 %v643
        %705 = vmatpush.bf16.msra.mxu0 %v637
        %706 = vmatpush.bf16.msra.mxu0 %v631
        %707 = vmatpush.bf16.msra.mxu0 %v625
        %708 = vmatpush.bf16.msra.mxu0 %v619
        %709 = vmatpush.bf16.msra.mxu0 %v613
        %710 = vmatpush.bf16.msra.mxu0 %v607
        %711 = vmatmul.bf16.gmra.mxu0 %v400
        %v712 = vpop.f32.mrf.mxu0
        %v713 = vadd.f32 %v451, %v712
        %v714 = vpop.f32.mrf.mxu0
        %715 = vdwg.mxu0
        %716 = vmatpush.bf16.msra.mxu0 %v650
        %717 = vmatpush.bf16.msra.mxu0 %v644
        %718 = vmatpush.bf16.msra.mxu0 %v638
        %719 = vmatpush.bf16.msra.mxu0 %v632
        %720 = vmatpush.bf16.msra.mxu0 %v626
        %721 = vmatpush.bf16.msra.mxu0 %v620
        %722 = vmatpush.bf16.msra.mxu0 %v614
        %723 = vmatpush.bf16.msra.mxu0 %v608
        %724 = vmatmul.bf16.gmra.mxu0 %v400
        %v725 = vpop.f32.mrf.mxu0
        %v726 = vadd.f32 %v452, %v725
        %v727 = vpop.f32.mrf.mxu0
        %728 = vdwg.mxu0
        %729 = vmatpush.bf16.msra.mxu0 %v651
        %730 = vmatpush.bf16.msra.mxu0 %v645
        %731 = vmatpush.bf16.msra.mxu0 %v639
        %732 = vmatpush.bf16.msra.mxu0 %v633
        %733 = vmatpush.bf16.msra.mxu0 %v627
        %734 = vmatpush.bf16.msra.mxu0 %v621
        %735 = vmatpush.bf16.msra.mxu0 %v615
        %736 = vmatpush.bf16.msra.mxu0 %v609
        %737 = vmatmul.bf16.gmra.mxu0 %v400
        %v738 = vpop.f32.mrf.mxu0
        %v739 = vadd.f32 %v453, %v738
        %v740 = vpop.f32.mrf.mxu0
        %741 = vdwg.mxu0
        %742 = vmatpush.bf16.msra.mxu0 %v652
        %743 = vmatpush.bf16.msra.mxu0 %v646
        %744 = vmatpush.bf16.msra.mxu0 %v640
        %745 = vmatpush.bf16.msra.mxu0 %v634
        %746 = vmatpush.bf16.msra.mxu0 %v628
        %747 = vmatpush.bf16.msra.mxu0 %v622
        %748 = vmatpush.bf16.msra.mxu0 %v616
        %749 = vmatpush.bf16.msra.mxu0 %v610
        %750 = vmatmul.bf16.gmra.mxu0 %v400
        %v751 = vpop.f32.mrf.mxu0
        %v752 = vadd.f32 %v454, %v751
        %v753 = vpop.f32.mrf.mxu0
        %754 = vdwg.mxu0
        %755 = vmatpush.bf16.msra.mxu0 %v653
        %756 = vmatpush.bf16.msra.mxu0 %v647
        %757 = vmatpush.bf16.msra.mxu0 %v641
        %758 = vmatpush.bf16.msra.mxu0 %v635
        %759 = vmatpush.bf16.msra.mxu0 %v629
        %760 = vmatpush.bf16.msra.mxu0 %v623
        %761 = vmatpush.bf16.msra.mxu0 %v617
        %762 = vmatpush.bf16.msra.mxu0 %v611
        %763 = vmatmul.bf16.gmra.mxu0 %v400
        %v764 = vpop.f32.mrf.mxu0
        %v765 = vadd.f32 %v455, %v764
        %v766 = vpop.f32.mrf.mxu0
        %767 = vdwg.mxu0
        %768 = vmatpush.bf16.msra.mxu0 %v654
        %769 = vmatpush.bf16.msra.mxu0 %v648
        %770 = vmatpush.bf16.msra.mxu0 %v642
        %771 = vmatpush.bf16.msra.mxu0 %v636
        %772 = vmatpush.bf16.msra.mxu0 %v630
        %773 = vmatpush.bf16.msra.mxu0 %v624
        %774 = vmatpush.bf16.msra.mxu0 %v618
        %775 = vmatpush.bf16.msra.mxu0 %v612
        %776 = vmatmul.bf16.gmra.mxu0 %v400
        %v777 = vpop.f32.mrf.mxu0
        %v778 = vadd.f32 %v456, %v777
        %v779 = vpop.f32.mrf.mxu0
        %780 = vdwg.mxu0
        %v781 = vmax.f32 %v713, 0.0
        %v782 = vmax.f32 %v726, 0.0
        %v783 = vmax.f32 %v739, 0.0
        %v784 = vmax.f32 %v752, 0.0
        %v785 = vmax.f32 %v765, 0.0
        %v786 = vmax.f32 %v778, 0.0
        %v787 = vld [vmem:[%s5] sm:$0x3]
        %v789 = vperm.slane %v787, 0
        %v790 = vperm.slane %v787, 1
        %v793 = vmul.f32 %v781, %v789
        %v794 = vmul.f32 %v782, %v790
        %v795 = vadd.f32 %v793, %v794
        %796 = vadd.xlane.f32.xlu0 %v795
        %v797 = vpop.xlane.xlu0 %796
        %v798 = vld [vmem:[#allocation2] sm:$0x1]
        %v800 = vperm.slane %v798, 0
        %v802 = vadd.f32 %v797, %v800
        %v803 = vpack.c.bf16 %v783, %v783
        %v804 = vpack.c.bf16 %v784, %v784
        %v805 = vpack.c.bf16 %v785, %v785
        %v806 = vpack.c.bf16 %v786, %v786
        %v807 = vld [vmem:[#allocation6] sm:$0xff]
        %v808 = vld [vmem:[#allocation6 + $0x8] sm:$0xff]
        %v809 = vld [vmem:[#allocation6 + $0x10] sm:$0xff]
        %v810 = vld [vmem:[#allocation6 + $0x18] sm:$0xff]
        %v811 = vld [vmem:[#allocation6 + $0x20] sm:$0xff]
        %v812 = vld [vmem:[#allocation6 + $0x28] sm:$0xff]
        %v813 = vld [vmem:[#allocation6 + $0x30] sm:$0xff]
        %v814 = vld [vmem:[#allocation6 + $0x38] sm:$0xff]
        %v815 = vld [vmem:[#allocation6 + $0x40] sm:$0xff]
        %v816 = vld [vmem:[#allocation6 + $0x48] sm:$0xff]
        %v817 = vld [vmem:[#allocation6 + $0x50] sm:$0xff]
        %v818 = vld [vmem:[#allocation6 + $0x58] sm:$0xff]
        %v819 = vld [vmem:[#allocation6 + $0x60] sm:$0xff]
        %v820 = vld [vmem:[#allocation6 + $0x68] sm:$0xff]
        %v821 = vld [vmem:[#allocation6 + $0x70] sm:$0xff]
        %v822 = vld [vmem:[#allocation6 + $0x78] sm:$0xff]
        %v823 = vld [vmem:[#allocation6 + $0x80] sm:$0xff]
        %v824 = vld [vmem:[#allocation6 + $0x88] sm:$0xff]
        %v825 = vld [vmem:[#allocation6 + $0x90] sm:$0xff]
        %v826 = vld [vmem:[#allocation6 + $0x98] sm:$0xff]
        %v827 = vld [vmem:[#allocation6 + $0xa0] sm:$0xff]
        %v828 = vld [vmem:[#allocation6 + $0xa8] sm:$0xff]
        %v829 = vld [vmem:[#allocation6 + $0xb0] sm:$0xff]
        %v830 = vld [vmem:[#allocation6 + $0xb8] sm:$0xff]
        %v831 = vld [vmem:[#allocation6 + $0xc0] sm:$0xff]
        %v832 = vld [vmem:[#allocation6 + $0xc8] sm:$0xff]
        %v833 = vld [vmem:[#allocation6 + $0xd0] sm:$0xff]
        %v834 = vld [vmem:[#allocation6 + $0xd8] sm:$0xff]
        %v835 = vld [vmem:[#allocation6 + $0xe0] sm:$0xff]
        %v836 = vld [vmem:[#allocation6 + $0xe8] sm:$0xff]
        %v837 = vld [vmem:[#allocation6 + $0xf0] sm:$0xff]
        %v838 = vld [vmem:[#allocation6 + $0xf8] sm:$0xff]
        %v839 = vld [vmem:[#allocation6 + $0x100] sm:$0xff]
        %v840 = vld [vmem:[#allocation6 + $0x108] sm:$0xff]
        %v841 = vld [vmem:[#allocation6 + $0x110] sm:$0xff]
        %v842 = vld [vmem:[#allocation6 + $0x118] sm:$0xff]
        %v843 = vld [vmem:[#allocation6 + $0x120] sm:$0xff]
        %v844 = vld [vmem:[#allocation6 + $0x128] sm:$0xff]
        %v845 = vld [vmem:[#allocation6 + $0x130] sm:$0xff]
        %v846 = vld [vmem:[#allocation6 + $0x138] sm:$0xff]
        %v847 = vld [vmem:[#allocation6 + $0x140] sm:$0xff]
        %v848 = vld [vmem:[#allocation6 + $0x148] sm:$0xff]
        %v849 = vld [vmem:[#allocation6 + $0x150] sm:$0xff]
        %v850 = vld [vmem:[#allocation6 + $0x158] sm:$0xff]
        %v851 = vld [vmem:[#allocation6 + $0x160] sm:$0xff]
        %v852 = vld [vmem:[#allocation6 + $0x168] sm:$0xff]
        %v853 = vld [vmem:[#allocation6 + $0x170] sm:$0xff]
        %v854 = vld [vmem:[#allocation6 + $0x178] sm:$0xff]
        %v855 = vld [vmem:[#allocation6 + $0x180] sm:$0xff]
        %v856 = vld [vmem:[#allocation6 + $0x188] sm:$0xff]
        %v857 = vld [vmem:[#allocation6 + $0x190] sm:$0xff]
        %v858 = vld [vmem:[#allocation6 + $0x198] sm:$0xff]
        %v859 = vld [vmem:[#allocation6 + $0x1a0] sm:$0xff]
        %v860 = vld [vmem:[#allocation6 + $0x1a8] sm:$0xff]
        %v861 = vld [vmem:[#allocation6 + $0x1b0] sm:$0xff]
        %v862 = vld [vmem:[#allocation6 + $0x1b8] sm:$0xff]
        %v863 = vld [vmem:[#allocation6 + $0x1c0] sm:$0xff]
        %v864 = vld [vmem:[#allocation6 + $0x1c8] sm:$0xff]
        %v865 = vld [vmem:[#allocation6 + $0x1d0] sm:$0xff]
        %v866 = vld [vmem:[#allocation6 + $0x1d8] sm:$0xff]
        %v867 = vld [vmem:[#allocation6 + $0x1e0] sm:$0xff]
        %v868 = vld [vmem:[#allocation6 + $0x1e8] sm:$0xff]
        %v869 = vld [vmem:[#allocation6 + $0x1f0] sm:$0xff]
        %v870 = vld [vmem:[#allocation6 + $0x1f8] sm:$0xff]
        %v871 = vld [vmem:[#allocation6 + $0x200] sm:$0xff]
        %v872 = vld [vmem:[#allocation6 + $0x208] sm:$0xff]
        %v873 = vld [vmem:[#allocation6 + $0x210] sm:$0xff]
        %v874 = vld [vmem:[#allocation6 + $0x218] sm:$0xff]
        %v875 = vld [vmem:[#allocation6 + $0x220] sm:$0xff]
        %v876 = vld [vmem:[#allocation6 + $0x228] sm:$0xff]
        %v877 = vld [vmem:[#allocation6 + $0x230] sm:$0xff]
        %v878 = vld [vmem:[#allocation6 + $0x238] sm:$0xff]
        %v879 = vld [vmem:[#allocation6 + $0x240] sm:$0xff]
        %v880 = vld [vmem:[#allocation6 + $0x248] sm:$0xff]
        %v881 = vld [vmem:[#allocation6 + $0x250] sm:$0xff]
        %v882 = vld [vmem:[#allocation6 + $0x258] sm:$0xff]
        %v883 = vld [vmem:[#allocation6 + $0x260] sm:$0xff]
        %v884 = vld [vmem:[#allocation6 + $0x268] sm:$0xff]
        %v885 = vld [vmem:[#allocation6 + $0x270] sm:$0xff]
        %v886 = vld [vmem:[#allocation6 + $0x278] sm:$0xff]
        %v887 = vld [vmem:[#allocation6 + $0x280] sm:$0xff]
        %v888 = vld [vmem:[#allocation6 + $0x288] sm:$0xff]
        %v889 = vld [vmem:[#allocation6 + $0x290] sm:$0xff]
        %v890 = vld [vmem:[#allocation6 + $0x298] sm:$0xff]
        %v891 = vld [vmem:[#allocation6 + $0x2a0] sm:$0xff]
        %v892 = vld [vmem:[#allocation6 + $0x2a8] sm:$0xff]
        %v893 = vld [vmem:[#allocation6 + $0x2b0] sm:$0xff]
        %v894 = vld [vmem:[#allocation6 + $0x2b8] sm:$0xff]
        %v895 = vld [vmem:[#allocation6 + $0x2c0] sm:$0xff]
        %v896 = vld [vmem:[#allocation6 + $0x2c8] sm:$0xff]
        %v897 = vld [vmem:[#allocation6 + $0x2d0] sm:$0xff]
        %v898 = vld [vmem:[#allocation6 + $0x2d8] sm:$0xff]
        %v899 = vld [vmem:[#allocation6 + $0x2e0] sm:$0xff]
        %v900 = vld [vmem:[#allocation6 + $0x2e8] sm:$0xff]
        %v901 = vld [vmem:[#allocation6 + $0x2f0] sm:$0xff]
        %v902 = vld [vmem:[#allocation6 + $0x2f8] sm:$0xff]
        %v903 = vld [vmem:[#allocation6 + $0x300] sm:$0xff]
        %v904 = vld [vmem:[#allocation6 + $0x308] sm:$0xff]
        %v905 = vld [vmem:[#allocation6 + $0x310] sm:$0xff]
        %v906 = vld [vmem:[#allocation6 + $0x318] sm:$0xff]
        %v907 = vld [vmem:[#allocation6 + $0x320] sm:$0xff]
        %v908 = vld [vmem:[#allocation6 + $0x328] sm:$0xff]
        %v909 = vld [vmem:[#allocation6 + $0x330] sm:$0xff]
        %v910 = vld [vmem:[#allocation6 + $0x338] sm:$0xff]
        %v911 = vld [vmem:[#allocation6 + $0x340] sm:$0xff]
        %v912 = vld [vmem:[#allocation6 + $0x348] sm:$0xff]
        %v913 = vld [vmem:[#allocation6 + $0x350] sm:$0xff]
        %v914 = vld [vmem:[#allocation6 + $0x358] sm:$0xff]
        %v915 = vld [vmem:[#allocation6 + $0x360] sm:$0xff]
        %v916 = vld [vmem:[#allocation6 + $0x368] sm:$0xff]
        %v917 = vld [vmem:[#allocation6 + $0x370] sm:$0xff]
        %v918 = vld [vmem:[#allocation6 + $0x378] sm:$0xff]
        %v919 = vld [vmem:[#allocation6 + $0x380] sm:$0xff]
        %v920 = vld [vmem:[#allocation6 + $0x388] sm:$0xff]
        %v921 = vld [vmem:[#allocation6 + $0x390] sm:$0xff]
        %v922 = vld [vmem:[#allocation6 + $0x398] sm:$0xff]
        %v923 = vld [vmem:[#allocation6 + $0x3a0] sm:$0xff]
        %v924 = vld [vmem:[#allocation6 + $0x3a8] sm:$0xff]
        %v925 = vld [vmem:[#allocation6 + $0x3b0] sm:$0xff]
        %v926 = vld [vmem:[#allocation6 + $0x3b8] sm:$0xff]
        %v927 = vld [vmem:[#allocation6 + $0x3c0] sm:$0xff]
        %v928 = vld [vmem:[#allocation6 + $0x3c8] sm:$0xff]
        %v929 = vld [vmem:[#allocation6 + $0x3d0] sm:$0xff]
        %v930 = vld [vmem:[#allocation6 + $0x3d8] sm:$0xff]
        %v931 = vld [vmem:[#allocation6 + $0x3e0] sm:$0xff]
        %v932 = vld [vmem:[#allocation6 + $0x3e8] sm:$0xff]
        %v933 = vld [vmem:[#allocation6 + $0x3f0] sm:$0xff]
        %v934 = vld [vmem:[#allocation6 + $0x3f8] sm:$0xff]
        %v935 = vld [vmem:[%s8] sm:$0xf]
        %v937 = vperm.slane %v935, 0
        %v938 = vperm.slane %v935, 1
        %v939 = vperm.slane %v935, 2
        %v940 = vperm.slane %v935, 3
        %v1073 = vunpack.c.l.b16 %v807
        %v1074 = vunpack.c.h.b16 %v807
        %v1075 = vunpack.c.l.b16 %v808
        %v1076 = vunpack.c.h.b16 %v808
        %v1077 = vunpack.c.l.b16 %v809
        %v1078 = vunpack.c.h.b16 %v809
        %v1079 = vunpack.c.l.b16 %v810
        %v1080 = vunpack.c.h.b16 %v810
        %v1081 = vunpack.c.l.b16 %v811
        %v1082 = vunpack.c.h.b16 %v811
        %v1083 = vunpack.c.l.b16 %v812
        %v1084 = vunpack.c.h.b16 %v812
        %v1085 = vunpack.c.l.b16 %v813
        %v1086 = vunpack.c.h.b16 %v813
        %v1087 = vunpack.c.l.b16 %v814
        %v1088 = vunpack.c.h.b16 %v814
        %v1089 = vunpack.c.l.b16 %v815
        %v1090 = vunpack.c.h.b16 %v815
        %v1091 = vunpack.c.l.b16 %v816
        %v1092 = vunpack.c.h.b16 %v816
        %v1093 = vunpack.c.l.b16 %v817
        %v1094 = vunpack.c.h.b16 %v817
        %v1095 = vunpack.c.l.b16 %v818
        %v1096 = vunpack.c.h.b16 %v818
        %v1097 = vunpack.c.l.b16 %v819
        %v1098 = vunpack.c.h.b16 %v819
        %v1099 = vunpack.c.l.b16 %v820
        %v1100 = vunpack.c.h.b16 %v820
        %v1101 = vunpack.c.l.b16 %v821
        %v1102 = vunpack.c.h.b16 %v821
        %v1103 = vunpack.c.l.b16 %v822
        %v1104 = vunpack.c.h.b16 %v822
        %v1105 = vunpack.c.l.b16 %v823
        %v1106 = vunpack.c.h.b16 %v823
        %v1107 = vunpack.c.l.b16 %v824
        %v1108 = vunpack.c.h.b16 %v824
        %v1109 = vunpack.c.l.b16 %v825
        %v1110 = vunpack.c.h.b16 %v825
        %v1111 = vunpack.c.l.b16 %v826
        %v1112 = vunpack.c.h.b16 %v826
        %v1113 = vunpack.c.l.b16 %v827
        %v1114 = vunpack.c.h.b16 %v827
        %v1115 = vunpack.c.l.b16 %v828
        %v1116 = vunpack.c.h.b16 %v828
        %v1117 = vunpack.c.l.b16 %v829
        %v1118 = vunpack.c.h.b16 %v829
        %v1119 = vunpack.c.l.b16 %v830
        %v1120 = vunpack.c.h.b16 %v830
        %v1121 = vunpack.c.l.b16 %v831
        %v1122 = vunpack.c.h.b16 %v831
        %v1123 = vunpack.c.l.b16 %v832
        %v1124 = vunpack.c.h.b16 %v832
        %v1125 = vunpack.c.l.b16 %v833
        %v1126 = vunpack.c.h.b16 %v833
        %v1127 = vunpack.c.l.b16 %v834
        %v1128 = vunpack.c.h.b16 %v834
        %v1129 = vunpack.c.l.b16 %v835
        %v1130 = vunpack.c.h.b16 %v835
        %v1131 = vunpack.c.l.b16 %v836
        %v1132 = vunpack.c.h.b16 %v836
        %v1133 = vunpack.c.l.b16 %v837
        %v1134 = vunpack.c.h.b16 %v837
        %v1135 = vunpack.c.l.b16 %v838
        %v1136 = vunpack.c.h.b16 %v838
        %v1137 = vunpack.c.l.b16 %v839
        %v1138 = vunpack.c.h.b16 %v839
        %v1139 = vunpack.c.l.b16 %v840
        %v1140 = vunpack.c.h.b16 %v840
        %v1141 = vunpack.c.l.b16 %v841
        %v1142 = vunpack.c.h.b16 %v841
        %v1143 = vunpack.c.l.b16 %v842
        %v1144 = vunpack.c.h.b16 %v842
        %v1145 = vunpack.c.l.b16 %v843
        %v1146 = vunpack.c.h.b16 %v843
        %v1147 = vunpack.c.l.b16 %v844
        %v1148 = vunpack.c.h.b16 %v844
        %v1149 = vunpack.c.l.b16 %v845
        %v1150 = vunpack.c.h.b16 %v845
        %v1151 = vunpack.c.l.b16 %v846
        %v1152 = vunpack.c.h.b16 %v846
        %v1153 = vunpack.c.l.b16 %v847
        %v1154 = vunpack.c.h.b16 %v847
        %v1155 = vunpack.c.l.b16 %v848
        %v1156 = vunpack.c.h.b16 %v848
        %v1157 = vunpack.c.l.b16 %v849
        %v1158 = vunpack.c.h.b16 %v849
        %v1159 = vunpack.c.l.b16 %v850
        %v1160 = vunpack.c.h.b16 %v850
        %v1161 = vunpack.c.l.b16 %v851
        %v1162 = vunpack.c.h.b16 %v851
        %v1163 = vunpack.c.l.b16 %v852
        %v1164 = vunpack.c.h.b16 %v852
        %v1165 = vunpack.c.l.b16 %v853
        %v1166 = vunpack.c.h.b16 %v853
        %v1167 = vunpack.c.l.b16 %v854
        %v1168 = vunpack.c.h.b16 %v854
        %v1169 = vunpack.c.l.b16 %v855
        %v1170 = vunpack.c.h.b16 %v855
        %v1171 = vunpack.c.l.b16 %v856
        %v1172 = vunpack.c.h.b16 %v856
        %v1173 = vunpack.c.l.b16 %v857
        %v1174 = vunpack.c.h.b16 %v857
        %v1175 = vunpack.c.l.b16 %v858
        %v1176 = vunpack.c.h.b16 %v858
        %v1177 = vunpack.c.l.b16 %v859
        %v1178 = vunpack.c.h.b16 %v859
        %v1179 = vunpack.c.l.b16 %v860
        %v1180 = vunpack.c.h.b16 %v860
        %v1181 = vunpack.c.l.b16 %v861
        %v1182 = vunpack.c.h.b16 %v861
        %v1183 = vunpack.c.l.b16 %v862
        %v1184 = vunpack.c.h.b16 %v862
        %v1185 = vunpack.c.l.b16 %v863
        %v1186 = vunpack.c.h.b16 %v863
        %v1187 = vunpack.c.l.b16 %v864
        %v1188 = vunpack.c.h.b16 %v864
        %v1189 = vunpack.c.l.b16 %v865
        %v1190 = vunpack.c.h.b16 %v865
        %v1191 = vunpack.c.l.b16 %v866
        %v1192 = vunpack.c.h.b16 %v866
        %v1193 = vunpack.c.l.b16 %v867
        %v1194 = vunpack.c.h.b16 %v867
        %v1195 = vunpack.c.l.b16 %v868
        %v1196 = vunpack.c.h.b16 %v868
        %v1197 = vunpack.c.l.b16 %v869
        %v1198 = vunpack.c.h.b16 %v869
        %v1199 = vunpack.c.l.b16 %v870
        %v1200 = vunpack.c.h.b16 %v870
        %v1201 = vunpack.c.l.b16 %v871
        %v1202 = vunpack.c.h.b16 %v871
        %v1203 = vunpack.c.l.b16 %v872
        %v1204 = vunpack.c.h.b16 %v872
        %v1205 = vunpack.c.l.b16 %v873
        %v1206 = vunpack.c.h.b16 %v873
        %v1207 = vunpack.c.l.b16 %v874
        %v1208 = vunpack.c.h.b16 %v874
        %v1209 = vunpack.c.l.b16 %v875
        %v1210 = vunpack.c.h.b16 %v875
        %v1211 = vunpack.c.l.b16 %v876
        %v1212 = vunpack.c.h.b16 %v876
        %v1213 = vunpack.c.l.b16 %v877
        %v1214 = vunpack.c.h.b16 %v877
        %v1215 = vunpack.c.l.b16 %v878
        %v1216 = vunpack.c.h.b16 %v878
        %v1217 = vunpack.c.l.b16 %v879
        %v1218 = vunpack.c.h.b16 %v879
        %v1219 = vunpack.c.l.b16 %v880
        %v1220 = vunpack.c.h.b16 %v880
        %v1221 = vunpack.c.l.b16 %v881
        %v1222 = vunpack.c.h.b16 %v881
        %v1223 = vunpack.c.l.b16 %v882
        %v1224 = vunpack.c.h.b16 %v882
        %v1225 = vunpack.c.l.b16 %v883
        %v1226 = vunpack.c.h.b16 %v883
        %v1227 = vunpack.c.l.b16 %v884
        %v1228 = vunpack.c.h.b16 %v884
        %v1229 = vunpack.c.l.b16 %v885
        %v1230 = vunpack.c.h.b16 %v885
        %v1231 = vunpack.c.l.b16 %v886
        %v1232 = vunpack.c.h.b16 %v886
        %v1233 = vunpack.c.l.b16 %v887
        %v1234 = vunpack.c.h.b16 %v887
        %v1235 = vunpack.c.l.b16 %v888
        %v1236 = vunpack.c.h.b16 %v888
        %v1237 = vunpack.c.l.b16 %v889
        %v1238 = vunpack.c.h.b16 %v889
        %v1239 = vunpack.c.l.b16 %v890
        %v1240 = vunpack.c.h.b16 %v890
        %v1241 = vunpack.c.l.b16 %v891
        %v1242 = vunpack.c.h.b16 %v891
        %v1243 = vunpack.c.l.b16 %v892
        %v1244 = vunpack.c.h.b16 %v892
        %v1245 = vunpack.c.l.b16 %v893
        %v1246 = vunpack.c.h.b16 %v893
        %v1247 = vunpack.c.l.b16 %v894
        %v1248 = vunpack.c.h.b16 %v894
        %v1249 = vunpack.c.l.b16 %v895
        %v1250 = vunpack.c.h.b16 %v895
        %v1251 = vunpack.c.l.b16 %v896
        %v1252 = vunpack.c.h.b16 %v896
        %v1253 = vunpack.c.l.b16 %v897
        %v1254 = vunpack.c.h.b16 %v897
        %v1255 = vunpack.c.l.b16 %v898
        %v1256 = vunpack.c.h.b16 %v898
        %v1257 = vunpack.c.l.b16 %v899
        %v1258 = vunpack.c.h.b16 %v899
        %v1259 = vunpack.c.l.b16 %v900
        %v1260 = vunpack.c.h.b16 %v900
        %v1261 = vunpack.c.l.b16 %v901
        %v1262 = vunpack.c.h.b16 %v901
        %v1263 = vunpack.c.l.b16 %v902
        %v1264 = vunpack.c.h.b16 %v902
        %v1265 = vunpack.c.l.b16 %v903
        %v1266 = vunpack.c.h.b16 %v903
        %v1267 = vunpack.c.l.b16 %v904
        %v1268 = vunpack.c.h.b16 %v904
        %v1269 = vunpack.c.l.b16 %v905
        %v1270 = vunpack.c.h.b16 %v905
        %v1271 = vunpack.c.l.b16 %v906
        %v1272 = vunpack.c.h.b16 %v906
        %v1273 = vunpack.c.l.b16 %v907
        %v1274 = vunpack.c.h.b16 %v907
        %v1275 = vunpack.c.l.b16 %v908
        %v1276 = vunpack.c.h.b16 %v908
        %v1277 = vunpack.c.l.b16 %v909
        %v1278 = vunpack.c.h.b16 %v909
        %v1279 = vunpack.c.l.b16 %v910
        %v1280 = vunpack.c.h.b16 %v910
        %v1281 = vunpack.c.l.b16 %v911
        %v1282 = vunpack.c.h.b16 %v911
        %v1283 = vunpack.c.l.b16 %v912
        %v1284 = vunpack.c.h.b16 %v912
        %v1285 = vunpack.c.l.b16 %v913
        %v1286 = vunpack.c.h.b16 %v913
        %v1287 = vunpack.c.l.b16 %v914
        %v1288 = vunpack.c.h.b16 %v914
        %v1289 = vunpack.c.l.b16 %v915
        %v1290 = vunpack.c.h.b16 %v915
        %v1291 = vunpack.c.l.b16 %v916
        %v1292 = vunpack.c.h.b16 %v916
        %v1293 = vunpack.c.l.b16 %v917
        %v1294 = vunpack.c.h.b16 %v917
        %v1295 = vunpack.c.l.b16 %v918
        %v1296 = vunpack.c.h.b16 %v918
        %v1297 = vunpack.c.l.b16 %v919
        %v1298 = vunpack.c.h.b16 %v919
        %v1299 = vunpack.c.l.b16 %v920
        %v1300 = vunpack.c.h.b16 %v920
        %v1301 = vunpack.c.l.b16 %v921
        %v1302 = vunpack.c.h.b16 %v921
        %v1303 = vunpack.c.l.b16 %v922
        %v1304 = vunpack.c.h.b16 %v922
        %v1305 = vunpack.c.l.b16 %v923
        %v1306 = vunpack.c.h.b16 %v923
        %v1307 = vunpack.c.l.b16 %v924
        %v1308 = vunpack.c.h.b16 %v924
        %v1309 = vunpack.c.l.b16 %v925
        %v1310 = vunpack.c.h.b16 %v925
        %v1311 = vunpack.c.l.b16 %v926
        %v1312 = vunpack.c.h.b16 %v926
        %v1313 = vunpack.c.l.b16 %v927
        %v1314 = vunpack.c.h.b16 %v927
        %v1315 = vunpack.c.l.b16 %v928
        %v1316 = vunpack.c.h.b16 %v928
        %v1317 = vunpack.c.l.b16 %v929
        %v1318 = vunpack.c.h.b16 %v929
        %v1319 = vunpack.c.l.b16 %v930
        %v1320 = vunpack.c.h.b16 %v930
        %v1321 = vunpack.c.l.b16 %v931
        %v1322 = vunpack.c.h.b16 %v931
        %v1323 = vunpack.c.l.b16 %v932
        %v1324 = vunpack.c.h.b16 %v932
        %v1325 = vunpack.c.l.b16 %v933
        %v1326 = vunpack.c.h.b16 %v933
        %v1327 = vunpack.c.l.b16 %v934
        %v1328 = vunpack.c.h.b16 %v934
        %v1329 = vpack.c.b16 %v1077, %v1073
        %v1330 = vpack.c.b16 %v1078, %v1074
        %v1331 = vpack.c.b16 %v1079, %v1075
        %v1332 = vpack.c.b16 %v1080, %v1076
        %v1333 = vpack.c.b16 %v1085, %v1081
        %v1334 = vpack.c.b16 %v1086, %v1082
        %v1335 = vpack.c.b16 %v1087, %v1083
        %v1336 = vpack.c.b16 %v1088, %v1084
        %v1337 = vpack.c.b16 %v1093, %v1089
        %v1338 = vpack.c.b16 %v1094, %v1090
        %v1339 = vpack.c.b16 %v1095, %v1091
        %v1340 = vpack.c.b16 %v1096, %v1092
        %v1341 = vpack.c.b16 %v1101, %v1097
        %v1342 = vpack.c.b16 %v1102, %v1098
        %v1343 = vpack.c.b16 %v1103, %v1099
        %v1344 = vpack.c.b16 %v1104, %v1100
        %v1345 = vpack.c.b16 %v1109, %v1105
        %v1346 = vpack.c.b16 %v1110, %v1106
        %v1347 = vpack.c.b16 %v1111, %v1107
        %v1348 = vpack.c.b16 %v1112, %v1108
        %v1349 = vpack.c.b16 %v1117, %v1113
        %v1350 = vpack.c.b16 %v1118, %v1114
        %v1351 = vpack.c.b16 %v1119, %v1115
        %v1352 = vpack.c.b16 %v1120, %v1116
        %v1353 = vpack.c.b16 %v1125, %v1121
        %v1354 = vpack.c.b16 %v1126, %v1122
        %v1355 = vpack.c.b16 %v1127, %v1123
        %v1356 = vpack.c.b16 %v1128, %v1124
        %v1357 = vpack.c.b16 %v1133, %v1129
        %v1358 = vpack.c.b16 %v1134, %v1130
        %v1359 = vpack.c.b16 %v1135, %v1131
        %v1360 = vpack.c.b16 %v1136, %v1132
        %v1361 = vpack.c.b16 %v1141, %v1137
        %v1362 = vpack.c.b16 %v1142, %v1138
        %v1363 = vpack.c.b16 %v1143, %v1139
        %v1364 = vpack.c.b16 %v1144, %v1140
        %v1365 = vpack.c.b16 %v1149, %v1145
        %v1366 = vpack.c.b16 %v1150, %v1146
        %v1367 = vpack.c.b16 %v1151, %v1147
        %v1368 = vpack.c.b16 %v1152, %v1148
        %v1369 = vpack.c.b16 %v1157, %v1153
        %v1370 = vpack.c.b16 %v1158, %v1154
        %v1371 = vpack.c.b16 %v1159, %v1155
        %v1372 = vpack.c.b16 %v1160, %v1156
        %v1373 = vpack.c.b16 %v1165, %v1161
        %v1374 = vpack.c.b16 %v1166, %v1162
        %v1375 = vpack.c.b16 %v1167, %v1163
        %v1376 = vpack.c.b16 %v1168, %v1164
        %v1377 = vpack.c.b16 %v1173, %v1169
        %v1378 = vpack.c.b16 %v1174, %v1170
        %v1379 = vpack.c.b16 %v1175, %v1171
        %v1380 = vpack.c.b16 %v1176, %v1172
        %v1381 = vpack.c.b16 %v1181, %v1177
        %v1382 = vpack.c.b16 %v1182, %v1178
        %v1383 = vpack.c.b16 %v1183, %v1179
        %v1384 = vpack.c.b16 %v1184, %v1180
        %v1385 = vpack.c.b16 %v1189, %v1185
        %v1386 = vpack.c.b16 %v1190, %v1186
        %v1387 = vpack.c.b16 %v1191, %v1187
        %v1388 = vpack.c.b16 %v1192, %v1188
        %v1389 = vpack.c.b16 %v1197, %v1193
        %v1390 = vpack.c.b16 %v1198, %v1194
        %v1391 = vpack.c.b16 %v1199, %v1195
        %v1392 = vpack.c.b16 %v1200, %v1196
        %v1393 = vpack.c.b16 %v1205, %v1201
        %v1394 = vpack.c.b16 %v1206, %v1202
        %v1395 = vpack.c.b16 %v1207, %v1203
        %v1396 = vpack.c.b16 %v1208, %v1204
        %v1397 = vpack.c.b16 %v1213, %v1209
        %v1398 = vpack.c.b16 %v1214, %v1210
        %v1399 = vpack.c.b16 %v1215, %v1211
        %v1400 = vpack.c.b16 %v1216, %v1212
        %v1401 = vpack.c.b16 %v1221, %v1217
        %v1402 = vpack.c.b16 %v1222, %v1218
        %v1403 = vpack.c.b16 %v1223, %v1219
        %v1404 = vpack.c.b16 %v1224, %v1220
        %v1405 = vpack.c.b16 %v1229, %v1225
        %v1406 = vpack.c.b16 %v1230, %v1226
        %v1407 = vpack.c.b16 %v1231, %v1227
        %v1408 = vpack.c.b16 %v1232, %v1228
        %v1409 = vpack.c.b16 %v1237, %v1233
        %v1410 = vpack.c.b16 %v1238, %v1234
        %v1411 = vpack.c.b16 %v1239, %v1235
        %v1412 = vpack.c.b16 %v1240, %v1236
        %v1413 = vpack.c.b16 %v1245, %v1241
        %v1414 = vpack.c.b16 %v1246, %v1242
        %v1415 = vpack.c.b16 %v1247, %v1243
        %v1416 = vpack.c.b16 %v1248, %v1244
        %v1417 = vpack.c.b16 %v1253, %v1249
        %v1418 = vpack.c.b16 %v1254, %v1250
        %v1419 = vpack.c.b16 %v1255, %v1251
        %v1420 = vpack.c.b16 %v1256, %v1252
        %v1421 = vpack.c.b16 %v1261, %v1257
        %v1422 = vpack.c.b16 %v1262, %v1258
        %v1423 = vpack.c.b16 %v1263, %v1259
        %v1424 = vpack.c.b16 %v1264, %v1260
        %v1425 = vpack.c.b16 %v1269, %v1265
        %v1426 = vpack.c.b16 %v1270, %v1266
        %v1427 = vpack.c.b16 %v1271, %v1267
        %v1428 = vpack.c.b16 %v1272, %v1268
        %v1429 = vpack.c.b16 %v1277, %v1273
        %v1430 = vpack.c.b16 %v1278, %v1274
        %v1431 = vpack.c.b16 %v1279, %v1275
        %v1432 = vpack.c.b16 %v1280, %v1276
        %v1433 = vpack.c.b16 %v1285, %v1281
        %v1434 = vpack.c.b16 %v1286, %v1282
        %v1435 = vpack.c.b16 %v1287, %v1283
        %v1436 = vpack.c.b16 %v1288, %v1284
        %v1437 = vpack.c.b16 %v1293, %v1289
        %v1438 = vpack.c.b16 %v1294, %v1290
        %v1439 = vpack.c.b16 %v1295, %v1291
        %v1440 = vpack.c.b16 %v1296, %v1292
        %v1441 = vpack.c.b16 %v1301, %v1297
        %v1442 = vpack.c.b16 %v1302, %v1298
        %v1443 = vpack.c.b16 %v1303, %v1299
        %v1444 = vpack.c.b16 %v1304, %v1300
        %v1445 = vpack.c.b16 %v1309, %v1305
        %v1446 = vpack.c.b16 %v1310, %v1306
        %v1447 = vpack.c.b16 %v1311, %v1307
        %v1448 = vpack.c.b16 %v1312, %v1308
        %v1449 = vpack.c.b16 %v1317, %v1313
        %v1450 = vpack.c.b16 %v1318, %v1314
        %v1451 = vpack.c.b16 %v1319, %v1315
        %v1452 = vpack.c.b16 %v1320, %v1316
        %v1453 = vpack.c.b16 %v1325, %v1321
        %v1454 = vpack.c.b16 %v1326, %v1322
        %v1455 = vpack.c.b16 %v1327, %v1323
        %v1456 = vpack.c.b16 %v1328, %v1324
        %1585 = vmatpush.bf16.msra.mxu0 %v1357
        %1586 = vmatpush.bf16.msra.mxu0 %v1353
        %1587 = vmatpush.bf16.msra.mxu0 %v1349
        %1588 = vmatpush.bf16.msra.mxu0 %v1345
        %1589 = vmatpush.bf16.msra.mxu0 %v1341
        %1590 = vmatpush.bf16.msra.mxu0 %v1337
        %1591 = vmatpush.bf16.msra.mxu0 %v1333
        %1592 = vmatpush.bf16.msra.mxu0 %v1329
        %1593 = vmatmul.bf16.gmra.mxu0 %v803
        %v1594 = vpop.f32.mrf.mxu0
        %v1595 = vadd.f32 %v937, %v1594
        %v1596 = vpop.f32.mrf.mxu0
        %1597 = vdwg.mxu0
        %1598 = vmatpush.bf16.msra.mxu0 %v1389
        %1599 = vmatpush.bf16.msra.mxu0 %v1385
        %1600 = vmatpush.bf16.msra.mxu0 %v1381
        %1601 = vmatpush.bf16.msra.mxu0 %v1377
        %1602 = vmatpush.bf16.msra.mxu0 %v1373
        %1603 = vmatpush.bf16.msra.mxu0 %v1369
        %1604 = vmatpush.bf16.msra.mxu0 %v1365
        %1605 = vmatpush.bf16.msra.mxu0 %v1361
        %1606 = vmatmul.bf16.gmra.mxu0 %v804
        %v1607 = vpop.f32.mrf.mxu0
        %v1608 = vadd.f32 %v1595, %v1607
        %v1609 = vpop.f32.mrf.mxu0
        %1610 = vdwg.mxu0
        %1611 = vmatpush.bf16.msra.mxu0 %v1421
        %1612 = vmatpush.bf16.msra.mxu0 %v1417
        %1613 = vmatpush.bf16.msra.mxu0 %v1413
        %1614 = vmatpush.bf16.msra.mxu0 %v1409
        %1615 = vmatpush.bf16.msra.mxu0 %v1405
        %1616 = vmatpush.bf16.msra.mxu0 %v1401
        %1617 = vmatpush.bf16.msra.mxu0 %v1397
        %1618 = vmatpush.bf16.msra.mxu0 %v1393
        %1619 = vmatmul.bf16.gmra.mxu0 %v805
        %v1620 = vpop.f32.mrf.mxu0
        %v1621 = vadd.f32 %v1608, %v1620
        %v1622 = vpop.f32.mrf.mxu0
        %1623 = vdwg.mxu0
        %1624 = vmatpush.bf16.msra.mxu0 %v1453
        %1625 = vmatpush.bf16.msra.mxu0 %v1449
        %1626 = vmatpush.bf16.msra.mxu0 %v1445
        %1627 = vmatpush.bf16.msra.mxu0 %v1441
        %1628 = vmatpush.bf16.msra.mxu0 %v1437
        %1629 = vmatpush.bf16.msra.mxu0 %v1433
        %1630 = vmatpush.bf16.msra.mxu0 %v1429
        %1631 = vmatpush.bf16.msra.mxu0 %v1425
        %1632 = vmatmul.bf16.gmra.mxu0 %v806
        %v1633 = vpop.f32.mrf.mxu0
        %v1634 = vadd.f32 %v1621, %v1633
        %v1635 = vpop.f32.mrf.mxu0
        %1636 = vdwg.mxu0
        %1637 = vmatpush.bf16.msra.mxu0 %v1358
        %1638 = vmatpush.bf16.msra.mxu0 %v1354
        %1639 = vmatpush.bf16.msra.mxu0 %v1350
        %1640 = vmatpush.bf16.msra.mxu0 %v1346
        %1641 = vmatpush.bf16.msra.mxu0 %v1342
        %1642 = vmatpush.bf16.msra.mxu0 %v1338
        %1643 = vmatpush.bf16.msra.mxu0 %v1334
        %1644 = vmatpush.bf16.msra.mxu0 %v1330
        %1645 = vmatmul.bf16.gmra.mxu0 %v803
        %v1646 = vpop.f32.mrf.mxu0
        %v1647 = vadd.f32 %v938, %v1646
        %v1648 = vpop.f32.mrf.mxu0
        %1649 = vdwg.mxu0
        %1650 = vmatpush.bf16.msra.mxu0 %v1390
        %1651 = vmatpush.bf16.msra.mxu0 %v1386
        %1652 = vmatpush.bf16.msra.mxu0 %v1382
        %1653 = vmatpush.bf16.msra.mxu0 %v1378
        %1654 = vmatpush.bf16.msra.mxu0 %v1374
        %1655 = vmatpush.bf16.msra.mxu0 %v1370
        %1656 = vmatpush.bf16.msra.mxu0 %v1366
        %1657 = vmatpush.bf16.msra.mxu0 %v1362
        %1658 = vmatmul.bf16.gmra.mxu0 %v804
        %v1659 = vpop.f32.mrf.mxu0
        %v1660 = vadd.f32 %v1647, %v1659
        %v1661 = vpop.f32.mrf.mxu0
        %1662 = vdwg.mxu0
        %1663 = vmatpush.bf16.msra.mxu0 %v1422
        %1664 = vmatpush.bf16.msra.mxu0 %v1418
        %1665 = vmatpush.bf16.msra.mxu0 %v1414
        %1666 = vmatpush.bf16.msra.mxu0 %v1410
        %1667 = vmatpush.bf16.msra.mxu0 %v1406
        %1668 = vmatpush.bf16.msra.mxu0 %v1402
        %1669 = vmatpush.bf16.msra.mxu0 %v1398
        %1670 = vmatpush.bf16.msra.mxu0 %v1394
        %1671 = vmatmul.bf16.gmra.mxu0 %v805
        %v1672 = vpop.f32.mrf.mxu0
        %v1673 = vadd.f32 %v1660, %v1672
        %v1674 = vpop.f32.mrf.mxu0
        %1675 = vdwg.mxu0
        %1676 = vmatpush.bf16.msra.mxu0 %v1454
        %1677 = vmatpush.bf16.msra.mxu0 %v1450
        %1678 = vmatpush.bf16.msra.mxu0 %v1446
        %1679 = vmatpush.bf16.msra.mxu0 %v1442
        %1680 = vmatpush.bf16.msra.mxu0 %v1438
        %1681 = vmatpush.bf16.msra.mxu0 %v1434
        %1682 = vmatpush.bf16.msra.mxu0 %v1430
        %1683 = vmatpush.bf16.msra.mxu0 %v1426
        %1684 = vmatmul.bf16.gmra.mxu0 %v806
        %v1685 = vpop.f32.mrf.mxu0
        %v1686 = vadd.f32 %v1673, %v1685
        %v1687 = vpop.f32.mrf.mxu0
        %1688 = vdwg.mxu0
        %1689 = vmatpush.bf16.msra.mxu0 %v1359
        %1690 = vmatpush.bf16.msra.mxu0 %v1355
        %1691 = vmatpush.bf16.msra.mxu0 %v1351
        %1692 = vmatpush.bf16.msra.mxu0 %v1347
        %1693 = vmatpush.bf16.msra.mxu0 %v1343
        %1694 = vmatpush.bf16.msra.mxu0 %v1339
        %1695 = vmatpush.bf16.msra.mxu0 %v1335
        %1696 = vmatpush.bf16.msra.mxu0 %v1331
        %1697 = vmatmul.bf16.gmra.mxu0 %v803
        %v1698 = vpop.f32.mrf.mxu0
        %v1699 = vadd.f32 %v939, %v1698
        %v1700 = vpop.f32.mrf.mxu0
        %1701 = vdwg.mxu0
        %1702 = vmatpush.bf16.msra.mxu0 %v1391
        %1703 = vmatpush.bf16.msra.mxu0 %v1387
        %1704 = vmatpush.bf16.msra.mxu0 %v1383
        %1705 = vmatpush.bf16.msra.mxu0 %v1379
        %1706 = vmatpush.bf16.msra.mxu0 %v1375
        %1707 = vmatpush.bf16.msra.mxu0 %v1371
        %1708 = vmatpush.bf16.msra.mxu0 %v1367
        %1709 = vmatpush.bf16.msra.mxu0 %v1363
        %1710 = vmatmul.bf16.gmra.mxu0 %v804
        %v1711 = vpop.f32.mrf.mxu0
        %v1712 = vadd.f32 %v1699, %v1711
        %v1713 = vpop.f32.mrf.mxu0
        %1714 = vdwg.mxu0
        %1715 = vmatpush.bf16.msra.mxu0 %v1423
        %1716 = vmatpush.bf16.msra.mxu0 %v1419
        %1717 = vmatpush.bf16.msra.mxu0 %v1415
        %1718 = vmatpush.bf16.msra.mxu0 %v1411
        %1719 = vmatpush.bf16.msra.mxu0 %v1407
        %1720 = vmatpush.bf16.msra.mxu0 %v1403
        %1721 = vmatpush.bf16.msra.mxu0 %v1399
        %1722 = vmatpush.bf16.msra.mxu0 %v1395
        %1723 = vmatmul.bf16.gmra.mxu0 %v805
        %v1724 = vpop.f32.mrf.mxu0
        %v1725 = vadd.f32 %v1712, %v1724
        %v1726 = vpop.f32.mrf.mxu0
        %1727 = vdwg.mxu0
        %1728 = vmatpush.bf16.msra.mxu0 %v1455
        %1729 = vmatpush.bf16.msra.mxu0 %v1451
        %1730 = vmatpush.bf16.msra.mxu0 %v1447
        %1731 = vmatpush.bf16.msra.mxu0 %v1443
        %1732 = vmatpush.bf16.msra.mxu0 %v1439
        %1733 = vmatpush.bf16.msra.mxu0 %v1435
        %1734 = vmatpush.bf16.msra.mxu0 %v1431
        %1735 = vmatpush.bf16.msra.mxu0 %v1427
        %1736 = vmatmul.bf16.gmra.mxu0 %v806
        %v1737 = vpop.f32.mrf.mxu0
        %v1738 = vadd.f32 %v1725, %v1737
        %v1739 = vpop.f32.mrf.mxu0
        %1740 = vdwg.mxu0
        %1741 = vmatpush.bf16.msra.mxu0 %v1360
        %1742 = vmatpush.bf16.msra.mxu0 %v1356
        %1743 = vmatpush.bf16.msra.mxu0 %v1352
        %1744 = vmatpush.bf16.msra.mxu0 %v1348
        %1745 = vmatpush.bf16.msra.mxu0 %v1344
        %1746 = vmatpush.bf16.msra.mxu0 %v1340
        %1747 = vmatpush.bf16.msra.mxu0 %v1336
        %1748 = vmatpush.bf16.msra.mxu0 %v1332
        %1749 = vmatmul.bf16.gmra.mxu0 %v803
        %v1750 = vpop.f32.mrf.mxu0
        %v1751 = vadd.f32 %v940, %v1750
        %v1752 = vpop.f32.mrf.mxu0
        %1753 = vdwg.mxu0
        %1754 = vmatpush.bf16.msra.mxu0 %v1392
        %1755 = vmatpush.bf16.msra.mxu0 %v1388
        %1756 = vmatpush.bf16.msra.mxu0 %v1384
        %1757 = vmatpush.bf16.msra.mxu0 %v1380
        %1758 = vmatpush.bf16.msra.mxu0 %v1376
        %1759 = vmatpush.bf16.msra.mxu0 %v1372
        %1760 = vmatpush.bf16.msra.mxu0 %v1368
        %1761 = vmatpush.bf16.msra.mxu0 %v1364
        %1762 = vmatmul.bf16.gmra.mxu0 %v804
        %v1763 = vpop.f32.mrf.mxu0
        %v1764 = vadd.f32 %v1751, %v1763
        %v1765 = vpop.f32.mrf.mxu0
        %1766 = vdwg.mxu0
        %1767 = vmatpush.bf16.msra.mxu0 %v1424
        %1768 = vmatpush.bf16.msra.mxu0 %v1420
        %1769 = vmatpush.bf16.msra.mxu0 %v1416
        %1770 = vmatpush.bf16.msra.mxu0 %v1412
        %1771 = vmatpush.bf16.msra.mxu0 %v1408
        %1772 = vmatpush.bf16.msra.mxu0 %v1404
        %1773 = vmatpush.bf16.msra.mxu0 %v1400
        %1774 = vmatpush.bf16.msra.mxu0 %v1396
        %1775 = vmatmul.bf16.gmra.mxu0 %v805
        %v1776 = vpop.f32.mrf.mxu0
        %v1777 = vadd.f32 %v1764, %v1776
        %v1778 = vpop.f32.mrf.mxu0
        %1779 = vdwg.mxu0
        %1780 = vmatpush.bf16.msra.mxu0 %v1456
        %1781 = vmatpush.bf16.msra.mxu0 %v1452
        %1782 = vmatpush.bf16.msra.mxu0 %v1448
        %1783 = vmatpush.bf16.msra.mxu0 %v1444
        %1784 = vmatpush.bf16.msra.mxu0 %v1440
        %1785 = vmatpush.bf16.msra.mxu0 %v1436
        %1786 = vmatpush.bf16.msra.mxu0 %v1432
        %1787 = vmatpush.bf16.msra.mxu0 %v1428
        %1788 = vmatmul.bf16.gmra.mxu0 %v806
        %v1789 = vpop.f32.mrf.mxu0
        %v1790 = vadd.f32 %v1777, %v1789
        %v1791 = vpop.f32.mrf.mxu0
        %1792 = vdwg.mxu0
        %v1793 = vadd.f32 %v1634, %v1686
        %v1794 = vadd.f32 %v1793, %v1738
        %v1795 = vadd.f32 %v1794, %v1790
        %1796 = vadd.xlane.f32.xlu0 %v1795
        %v1797 = vpop.xlane.xlu0 %1796
        %v1798 = vmul.f32 %v1797, 0.001953125
        %v1799 = vsub.f32 %v802, %v1798
        %1801 = vset.pattern.permute.xlu0 0
        %1802 = vperm.xlu0 %1801, %v1799
        %v1803 = vpop.permute.xlu0 %1802
        %v1805 = vadd.f32 %v1634, %v1803
        %v1806 = vadd.f32 %v1686, %v1803
        %v1807 = vadd.f32 %v1738, %v1803
        %v1808 = vadd.f32 %v1790, %v1803
        %1809 = vst [vmem:[%s359] sm:$0xff] %v1805
        %1810 = vst [vmem:[%s359 + $0x8] sm:$0xff] %v1806
        %1811 = vst [vmem:[%s359 + $0x10] sm:$0xff] %v1807
        %1812 = vst [vmem:[%s359 + $0x18] sm:$0xff] %v1808
        %s1813 = sand.u32 %s229, 1
        %s1814 = scalar_lea.sflag [#allocation5], %s1813
        %s1815 = sand.u32 %s229, 1
        %s1816 = smul.addr %s1815, 32
        %s1817 = scalar_lea.vmem [#allocation8], %s1816
        // Predicated region
        $region65: #{tpu_custom_call.1} parent=55 // pred_check
          %p1818 = pneg %p239
        $region66: #{tpu_custom_call.1} parent=55 // pred_check_branch
          %1820 = sbr.rel (%p1818) target = $region68
        $region67: #{tpu_custom_call.1} parent=55 // pred_region
          %1822 = vsyncadd %s1814, 0
          %s1823 = smul.addr %s27, 4
          %s1824 = smul.addr %s1823, 8
          %s1825 = scalar_lea.hbm %s9, %s1824
          %s1827 = sshll.u32 %s1817, 4
          %s1828 = int_to_ptr.vmem [resolvable:$true] %s1827
          %s1829 = sshll.u32 %s1825, 4
          %s1830 = int_to_ptr.hbm [resolvable:$true] %s1829
          %1832 = dma.vmem_to_hbm [thread:$0]  %s1828, 512, %s1830, %s1814
        $region68: #{tpu_custom_call.1} parent=55 // pred_fallthru
          _
      $region56: #{tpu_custom_call.1} parent=5 // pred_fallthru
        _
      %p1833 = scmp.le.s32.totalorder 2, %s22
      // Predicated region
      $region69: #{tpu_custom_call.1} parent=5 // pred_check
        %p1834 = pneg %p1833
      $region70: #{tpu_custom_call.1} parent=5 // pred_check_branch
        %1836 = sbr.rel (%p1834) target = $region72
      $region71: #{tpu_custom_call.1} parent=5 // pred_region
        %s1837 = ssub.s32 %s22, 2
        // Predicated region
        $region73: #{tpu_custom_call.1} parent=71 // pred_check
          %p1838 = pneg %p245
        $region74: #{tpu_custom_call.1} parent=71 // pred_check_branch
          %1840 = sbr.rel (%p1838) target = $region76
        $region75: #{tpu_custom_call.1} parent=71 // pred_region
          %s1841 = sand.u32 %s230, 1
          %s1842 = scalar_lea.sflag [#allocation5], %s1841
          %s1843 = sand.u32 %s230, 1
          %s1844 = smul.addr %s1843, 32
          %s1845 = scalar_lea.vmem [#allocation8], %s1844
          %1847 = dma.done %s1842, 512
        $region76: #{tpu_custom_call.1} parent=71 // pred_fallthru
          _
      $region72: #{tpu_custom_call.1} parent=5 // pred_fallthru
        _
    $region6: #{tpu_custom_call.1} parent=1 // loop_footer
      %s26 = sadd.s32 1, %s22
    $region7: #{tpu_custom_call.1} parent=1 // loop_footer_branch
      %21 = sbr.rel target = $region3
    $region8: #{tpu_custom_call.1} parent=1 // loop_exit
      _
    %1848 = vsyncpa [#allocation4], 1
    %s1849 = scalar_lea.sflag [#allocation4], 1
    %1850 = vsyncpa %s1849, 1
    %1851 = vsyncpa [#allocation7], 1
    %1852 = vsyncpa [#allocation5], 1
    %s1853 = scalar_lea.sflag [#allocation5], 1
    %1854 = vsyncpa %s1853, 1

</llo_original>
